<compile_context>
chip_gen: v6e
topology: v6e:2x2x1
jax: 0.10.0
libtpu: 0.0.40
codegen_flags: <defaults>
</compile_context>

<pallas_src>
import math

import jax
import jax.numpy as jnp
from jax.experimental import pallas as pl
from jax.experimental.pallas import tpu as pltpu


# ----------------------------- fused Pallas kernel ---------------------------

def make_monstor_kernel(n_layers):
    """Returns a kernel computing all Conv(+ReLU) layers and the eval head."""

    def kernel(*refs):
        feat_ref, A_ref, mask_ref = refs[0], refs[1], refs[2]
        out_ref = refs[-1]
        layer_refs = refs[3:-1]             # 4 packed arrays per layer

        A = A_ref[...]                      # [N, N]  A[dst, src]
        mask = mask_ref[...]                # [N, N]  {0, 1}
        n = A.shape[0]

        # in-degrees, derived once from the resident mask.
        deg = jnp.sum(mask, axis=1, keepdims=True)           # [N, 1]
        has_in = deg > 0
        inv_deg = jnp.where(has_in, 1.0 / jnp.maximum(deg, 1.0), 0.0)
        mask_b = mask > 0

        h = feat_ref[...]                   # [N, F0]
        for l in range(n_layers):
            wp = layer_refs[4 * l][...]      # [din, 4*din] chunks (sum, mean, std, max)
            bp = layer_refs[4 * l + 1][...]  # [1, 4*din]
            wn = layer_refs[4 * l + 2][...]  # [5*din, dout] chunks (feat, sum, mean, max, std)
            bn = layer_refs[4 * l + 3][...]  # [1, dout]
            d = wp.shape[0]

            # fc_pool_src: one packed MXU pass.
            pooled = jnp.dot(h, wp, preferred_element_type=jnp.float32) + bp
            h_std = pooled[:, 2 * d:3 * d]
            h_max = pooled[:, 3 * d:4 * d]

            # sum / mean / std1 / std2 aggregations: ONE pass of A over a packed
            # [N, 4*din] slab (lane chunks: sum, mean, std, std^2).
            agg_in = jnp.concatenate([pooled[:, :3 * d], h_std * h_std], axis=1)
            neigh = jnp.dot(A, agg_in, preferred_element_type=jnp.float32)

            # per-lane-chunk scaling: 1.0 on the sum chunk, inv_deg elsewhere.
            lane = jax.lax.broadcasted_iota(jnp.int32, (n, 4 * d), 1)
            neigh = neigh * jnp.where(lane < d, jnp.float32(1.0), inv_deg)

            n_sum = neigh[:, :d]
            n_mean = neigh[:, d:2 * d]
            n_std1 = neigh[:, 2 * d:3 * d]
            n_std2 = neigh[:, 3 * d:4 * d]
            n_std = n_std2 - n_std1 * n_std1

            # Masked weighted max aggregation.  Loop over the d output features
            # (one [N, N] masked multiply + lane-max each) so cross-lane work is
            # O(d) per layer instead of an O(N) un-CSE'd broadcast chain.
            h_max_t = jnp.transpose(h_max)                   # [d, N] (src on lanes)
            cols = []
            for f in range(d):
                cand = jnp.where(mask_b, A * h_max_t[f:f + 1, :],
                                 jnp.float32(-jnp.inf))      # [N, N]
                cols.append(jnp.max(cand, axis=1, keepdims=True))
            n_max = jnp.concatenate(cols, axis=1)            # [N, d]

            # h_neigh[degs == 0, :] = 0
            n_sum = jnp.where(has_in, n_sum, 0.0)
            n_mean = jnp.where(has_in, n_mean, 0.0)
            n_max = jnp.where(has_in, n_max, 0.0)
            n_std = jnp.where(has_in, n_std, 0.0)

            # fc_neigh(concat(feat, h_neigh)): one packed MXU pass, fused ReLU.
            full = jnp.concatenate([h, n_sum, n_mean, n_max, n_std], axis=1)
            rst = jnp.dot(full, wn, preferred_element_type=jnp.float32) + bn
            h = jnp.maximum(rst, 0.0)

        # Eval-mode head: clamp(features[:, -1] + h.squeeze(), 0, 1).
        # The PyTorch max_delta / clipped_result are never returned in eval mode
        # -> deleted (removes the A @ prv matmul entirely).
        # TODO(synk): training-mode branch (returns un-clipped raw_result) not implemented.
        feat0 = feat_ref[...]
        f0 = feat0.shape[1]
        out_ref[...] = jnp.clip(feat0[:, f0 - 1:f0] + h, 0.0, 1.0)

    return kernel


# --------------------------------- wrapper -----------------------------------

def monstor_forward(features, A, mask, params):
    """Eval-mode MONSTOR forward (single fused pallas_call)."""
    n = features.shape[0]
    args = [features, A, mask]
    for p in params:
        args += [p["wp"], p["bp"], p["wn"], p["bn"]]

    in_specs = [pl.BlockSpec(a.shape, lambda i, nd=a.ndim: (0,) * nd) for a in args]
    out = pl.pallas_call(
        make_monstor_kernel(len(params)),
        out_shape=jax.ShapeDtypeStruct((n, 1), jnp.float32),
        grid=(1,),
        in_specs=in_specs,
        out_specs=pl.BlockSpec((n, 1), lambda i: (0, 0)),
        compiler_params=pltpu.CompilerParams(
            dimension_semantics=("arbitrary",),
            vmem_limit_bytes=32 * 1024 * 1024),
    )(*args)
    return out[:, 0]                            # h.squeeze() -> [N]


# --------------------------- parameter creation ------------------------------

def init_conv_params(key, din, dout):
    """Deterministic init mirroring the PyTorch module's shapes & init scheme,
    packed into the kernel's fused layout."""
    kw1, kb1, kw2, kb2 = jax.random.split(key, 4)
    gain = math.sqrt(2.0)                                   # calculate_gain('relu')

    # fc_pool_src: Linear(din, 4*din); xavier_uniform weight, default-uniform bias.
    bw1 = gain * math.sqrt(6.0 / (din + 4 * din))
    w_pool = jax.random.uniform(kw1, (4 * din, din), jnp.float32, -bw1, bw1)
    bb1 = 1.0 / math.sqrt(din)
    b_pool = jax.random.uniform(kb1, (4 * din,), jnp.float32, -bb1, bb1)

    # fc_neigh: Linear(5*din, dout)
    bw2 = gain * math.sqrt(6.0 / (5 * din + dout))
    w_neigh = jax.random.uniform(kw2, (dout, 5 * din), jnp.float32, -bw2, bw2)
    bb2 = 1.0 / math.sqrt(5 * din)
    b_neigh = jax.random.uniform(kb2, (dout,), jnp.float32, -bb2, bb2)

    # Torch splits fc_pool_src output as (sum, mean, max, std).  The kernel wants
    # lane order (sum, mean, std, max) so the mean-type chunks form a contiguous
    # prefix for the single A-aggregation matmul -> reorder row-chunks on pack.
    order = (0, 1, 3, 2)
    wp = jnp.concatenate([w_pool[c * din:(c + 1) * din, :] for c in order],
                         axis=0).T                                   # [din, 4*din]
    bp = jnp.concatenate([b_pool[c * din:(c + 1) * din] for c in order]
                         ).reshape(1, 4 * din)
    wn = w_neigh.T                          # [5*din, dout] rows: (feat, sum, mean, max, std)
    bn = b_neigh.reshape(1, dout)
    # NOTE: fc_pool_dst exists in the PyTorch module but is unused in forward().
    return {"wp": wp, "bp": bp, "wn": wn, "bn": bn}


# --------------------------- pure-JAX reference ------------------------------

def _ref_conv(feat, A, mask, deg, p):
    d = p["wp"].shape[0]
    pooled = feat @ p["wp"] + p["bp"]
    h_sum = pooled[:, :d]
    h_mean = pooled[:, d:2 * d]
    h_std = pooled[:, 2 * d:3 * d]
    h_max = pooled[:, 3 * d:4 * d]
    h_std2 = h_std ** 2
    inv_deg = jnp.where(deg > 0, 1.0 / deg, 0.0)
    n_sum = A @ h_sum
    n_mean = (A @ h_mean) * inv_deg
    n_std1 = (A @ h_std) * inv_deg
    n_std2 = (A @ h_std2) * inv_deg
    n_std = n_std2 - n_std1 ** 2
    prod = jnp.where(mask[:, :, None] > 0, A[:, :, None] * h_max[None, :, :], -jnp.inf)
    n_max = jnp.max(prod, axis=1)
    has_in = deg > 0
    n_sum, n_mean, n_max, n_std = [jnp.where(has_in, x, 0.0)
                                   for x in (n_sum, n_mean, n_max, n_std)]
    rst = jnp.concatenate([feat, n_sum, n_mean, n_max, n_std], axis=1) @ p["wn"] + p["bn"]
    return jnp.maximum(rst, 0.0)


def _ref_monstor(features, A, mask, params):
    deg = jnp.sum(mask, axis=1, keepdims=True)
    h = features
    for p in params:
        h = _ref_conv(h, A, mask, deg, p)
    raw = features[:, -1] + h[:, 0]
    return jnp.clip(raw, 0.0, 1.0)


# ---------------------------------- main -------------------------------------

if __name__ == "__main__":
    N, in_feats, n_hidden, n_layers = 16, 4, 8, 3

    key = jax.random.PRNGKey(0)
    kf, ke, kw, kp = jax.random.split(key, 4)

    features = jax.random.uniform(kf, (N, in_feats), jnp.float32)
    mask = (jax.random.uniform(ke, (N, N)) < 0.35).astype(jnp.float32)
    edge_w = jax.random.uniform(kw, (N, N), jnp.float32)
    A = mask * edge_w                                   # A[dst, src]

    dims = [in_feats] + [n_hidden] * (n_layers - 1) + [1]
    pkeys = jax.random.split(kp, n_layers)
    params = [init_conv_params(pkeys[i], dims[i], dims[i + 1])
              for i in range(n_layers)]

    fwd = jax.jit(monstor_forward)
    out = jax.block_until_ready(fwd(features, A, mask, params))

    ref = _ref_monstor(features, A, mask, params)
    assert out.shape == (N,)
    assert jnp.allclose(out, ref, atol=1e-4, rtol=1e-4), (out, ref)

    print("KERNEL_OK")
</pallas_src>

<mosaic_0001>
module attributes {stable_mosaic.version = 11 : i64} {
  func.func @kernel(%arg0: i32, %arg1: memref<16x4xf32, #tpu.memory_space<vmem>>, %arg2: memref<16x16xf32, #tpu.memory_space<vmem>>, %arg3: memref<16x16xf32, #tpu.memory_space<vmem>>, %arg4: memref<4x16xf32, #tpu.memory_space<vmem>>, %arg5: memref<1x16xf32, #tpu.memory_space<vmem>>, %arg6: memref<20x8xf32, #tpu.memory_space<vmem>>, %arg7: memref<1x8xf32, #tpu.memory_space<vmem>>, %arg8: memref<8x32xf32, #tpu.memory_space<vmem>>, %arg9: memref<1x32xf32, #tpu.memory_space<vmem>>, %arg10: memref<40x8xf32, #tpu.memory_space<vmem>>, %arg11: memref<1x8xf32, #tpu.memory_space<vmem>>, %arg12: memref<8x32xf32, #tpu.memory_space<vmem>>, %arg13: memref<1x32xf32, #tpu.memory_space<vmem>>, %arg14: memref<40x1xf32, #tpu.memory_space<vmem>>, %arg15: memref<1x1xf32, #tpu.memory_space<vmem>>, %arg16: memref<16x1xf32, #tpu.memory_space<vmem>>) attributes {dimension_semantics = [#tpu.dimension_semantics<arbitrary>], iteration_bounds = array<i64: 1>, scalar_prefetch = 0 : i64, scratch_operands = 0 : i64, tpu.core_type = #tpu.core_type<tc>, window_params = [{pipeline_mode = #tpu.pipeline_mode<synchronous>, transform_indices = @transform_0, window_bounds = array<i64: 16, 4>}, {pipeline_mode = #tpu.pipeline_mode<synchronous>, transform_indices = @transform_1, window_bounds = array<i64: 16, 16>}, {pipeline_mode = #tpu.pipeline_mode<synchronous>, transform_indices = @transform_2, window_bounds = array<i64: 16, 16>}, {pipeline_mode = #tpu.pipeline_mode<synchronous>, transform_indices = @transform_3, window_bounds = array<i64: 4, 16>}, {pipeline_mode = #tpu.pipeline_mode<synchronous>, transform_indices = @transform_4, window_bounds = array<i64: 1, 16>}, {pipeline_mode = #tpu.pipeline_mode<synchronous>, transform_indices = @transform_5, window_bounds = array<i64: 20, 8>}, {pipeline_mode = #tpu.pipeline_mode<synchronous>, transform_indices = @transform_6, window_bounds = array<i64: 1, 8>}, {pipeline_mode = #tpu.pipeline_mode<synchronous>, transform_indices = @transform_7, window_bounds = array<i64: 8, 32>}, {pipeline_mode = #tpu.pipeline_mode<synchronous>, transform_indices = @transform_8, window_bounds = array<i64: 1, 32>}, {pipeline_mode = #tpu.pipeline_mode<synchronous>, transform_indices = @transform_9, window_bounds = array<i64: 40, 8>}, {pipeline_mode = #tpu.pipeline_mode<synchronous>, transform_indices = @transform_10, window_bounds = array<i64: 1, 8>}, {pipeline_mode = #tpu.pipeline_mode<synchronous>, transform_indices = @transform_11, window_bounds = array<i64: 8, 32>}, {pipeline_mode = #tpu.pipeline_mode<synchronous>, transform_indices = @transform_12, window_bounds = array<i64: 1, 32>}, {pipeline_mode = #tpu.pipeline_mode<synchronous>, transform_indices = @transform_13, window_bounds = array<i64: 40, 1>}, {pipeline_mode = #tpu.pipeline_mode<synchronous>, transform_indices = @transform_14, window_bounds = array<i64: 1, 1>}, {pipeline_mode = #tpu.pipeline_mode<synchronous>, transform_indices = @transform_15, window_bounds = array<i64: 16, 1>}]} {
    %c0 = arith.constant 0 : index
    %c0_0 = arith.constant 0 : index
    %0 = vector.load %arg2[%c0, %c0_0] : memref<16x16xf32, #tpu.memory_space<vmem>>, vector<16x16xf32>
    %c0_1 = arith.constant 0 : index
    %c0_2 = arith.constant 0 : index
    %1 = vector.load %arg3[%c0_1, %c0_2] : memref<16x16xf32, #tpu.memory_space<vmem>>, vector<16x16xf32>
    %cst = arith.constant dense<0.000000e+00> : vector<16xf32>
    %2 = vector.multi_reduction <add>, %1, %cst [1] : vector<16x16xf32> to vector<16xf32>
    %3 = vector.shape_cast %2 : vector<16xf32> to vector<16x1xf32>
    %cst_3 = arith.constant 0.000000e+00 : f32
    %4 = vector.broadcast %cst_3 : f32 to vector<16x1xf32>
    %5 = arith.cmpf ogt, %3, %4 : vector<16x1xf32>
    %cst_4 = arith.constant 1.000000e+00 : f32
    %6 = vector.broadcast %cst_4 : f32 to vector<16x1xf32>
    %7 = arith.maximumf %3, %6 : vector<16x1xf32>
    %cst_5 = arith.constant 1.000000e+00 : f32
    %8 = vector.broadcast %cst_5 : f32 to vector<16x1xf32>
    %9 = arith.divf %8, %7 : vector<16x1xf32>
    %cst_6 = arith.constant 0.000000e+00 : f32
    %10 = vector.broadcast %cst_6 : f32 to vector<16x1xf32>
    %11 = arith.select %5, %9, %10 : vector<16x1xi1>, vector<16x1xf32>
    %cst_7 = arith.constant 0.000000e+00 : f32
    %12 = vector.broadcast %cst_7 : f32 to vector<16x16xf32>
    %13 = arith.cmpf ogt, %1, %12 : vector<16x16xf32>
    %c0_8 = arith.constant 0 : index
    %c0_9 = arith.constant 0 : index
    %14 = vector.load %arg1[%c0_8, %c0_9] : memref<16x4xf32, #tpu.memory_space<vmem>>, vector<16x4xf32>
    %c0_10 = arith.constant 0 : index
    %c0_11 = arith.constant 0 : index
    %15 = vector.load %arg4[%c0_10, %c0_11] : memref<4x16xf32, #tpu.memory_space<vmem>>, vector<4x16xf32>
    %c0_12 = arith.constant 0 : index
    %c0_13 = arith.constant 0 : index
    %16 = vector.load %arg5[%c0_12, %c0_13] : memref<1x16xf32, #tpu.memory_space<vmem>>, vector<1x16xf32>
    %c0_14 = arith.constant 0 : index
    %c0_15 = arith.constant 0 : index
    %17 = vector.load %arg6[%c0_14, %c0_15] : memref<20x8xf32, #tpu.memory_space<vmem>>, vector<20x8xf32>
    %c0_16 = arith.constant 0 : index
    %c0_17 = arith.constant 0 : index
    %18 = vector.load %arg7[%c0_16, %c0_17] : memref<1x8xf32, #tpu.memory_space<vmem>>, vector<1x8xf32>
    %cst_18 = arith.constant dense<0.000000e+00> : vector<16x16xf32>
    %19 = tpu.matmul %14, %15, %cst_18 {dimension_numbers = #tpu.dot_dimension_numbers<[1], [0], [0], [1], [0, 0, 1, 1], [], []>} : vector<16x4xf32>, vector<4x16xf32>, vector<16x16xf32> -> vector<16x16xf32>
    %20 = vector.broadcast %16 : vector<1x16xf32> to vector<16x16xf32>
    %21 = arith.addf %19, %20 : vector<16x16xf32>
    %22 = vector.extract_strided_slice %21 {offsets = [0, 8], sizes = [16, 4], strides = [1, 1]} : vector<16x16xf32> to vector<16x4xf32>
    %23 = vector.extract_strided_slice %21 {offsets = [0, 12], sizes = [16, 4], strides = [1, 1]} : vector<16x16xf32> to vector<16x4xf32>
    %24 = vector.extract_strided_slice %21 {offsets = [0, 0], sizes = [16, 12], strides = [1, 1]} : vector<16x16xf32> to vector<16x12xf32>
    %25 = arith.mulf %22, %22 : vector<16x4xf32>
    %26 = tpu.concatenate %24, %25 in 1 : vector<16x12xf32>, vector<16x4xf32> -> vector<16x16xf32>
    %cst_19 = arith.constant dense<0.000000e+00> : vector<16x16xf32>
    %27 = tpu.matmul %0, %26, %cst_19 {dimension_numbers = #tpu.dot_dimension_numbers<[1], [0], [0], [1], [0, 0, 1, 1], [], []>} : vector<16x16xf32>, vector<16x16xf32>, vector<16x16xf32> -> vector<16x16xf32>
    %28 = tpu.iota {dimensions = array<i32: 1>} : vector<16x16xi32>
    %c4_i32 = arith.constant 4 : i32
    %29 = vector.broadcast %c4_i32 : i32 to vector<16x16xi32>
    %30 = arith.cmpi slt, %28, %29 : vector<16x16xi32>
    %cst_20 = arith.constant 1.000000e+00 : f32
    %31 = vector.broadcast %cst_20 : f32 to vector<16x16xf32>
    %32 = vector.shape_cast %11 : vector<16x1xf32> to vector<16x1xf32>
    %33 = vector.broadcast %32 : vector<16x1xf32> to vector<16x16xf32>
    %34 = arith.select %30, %31, %33 : vector<16x16xi1>, vector<16x16xf32>
    %35 = arith.mulf %27, %34 : vector<16x16xf32>
    %36 = vector.extract_strided_slice %35 {offsets = [0, 0], sizes = [16, 4], strides = [1, 1]} : vector<16x16xf32> to vector<16x4xf32>
    %37 = vector.extract_strided_slice %35 {offsets = [0, 4], sizes = [16, 4], strides = [1, 1]} : vector<16x16xf32> to vector<16x4xf32>
    %38 = vector.extract_strided_slice %35 {offsets = [0, 8], sizes = [16, 4], strides = [1, 1]} : vector<16x16xf32> to vector<16x4xf32>
    %39 = vector.extract_strided_slice %35 {offsets = [0, 12], sizes = [16, 4], strides = [1, 1]} : vector<16x16xf32> to vector<16x4xf32>
    %40 = arith.mulf %38, %38 : vector<16x4xf32>
    %41 = arith.subf %39, %40 : vector<16x4xf32>
    %42 = tpu.transpose %23, [1, 0] : vector<16x4xf32> -> vector<4x16xf32>
    %43 = vector.extract_strided_slice %42 {offsets = [0, 0], sizes = [1, 16], strides = [1, 1]} : vector<4x16xf32> to vector<1x16xf32>
    %44 = vector.broadcast %43 : vector<1x16xf32> to vector<16x16xf32>
    %45 = arith.mulf %0, %44 : vector<16x16xf32>
    %cst_21 = arith.constant 0xFF800000 : f32
    %46 = vector.broadcast %cst_21 : f32 to vector<16x16xf32>
    %47 = arith.select %13, %45, %46 : vector<16x16xi1>, vector<16x16xf32>
    %cst_22 = arith.constant dense<0xFF800000> : vector<16xf32>
    %48 = vector.multi_reduction <maximumf>, %47, %cst_22 [1] : vector<16x16xf32> to vector<16xf32>
    %49 = vector.shape_cast %48 : vector<16xf32> to vector<16x1xf32>
    %50 = vector.extract_strided_slice %42 {offsets = [1, 0], sizes = [1, 16], strides = [1, 1]} : vector<4x16xf32> to vector<1x16xf32>
    %51 = vector.broadcast %50 : vector<1x16xf32> to vector<16x16xf32>
    %52 = arith.mulf %0, %51 : vector<16x16xf32>
    %cst_23 = arith.constant 0xFF800000 : f32
    %53 = vector.broadcast %cst_23 : f32 to vector<16x16xf32>
    %54 = arith.select %13, %52, %53 : vector<16x16xi1>, vector<16x16xf32>
    %cst_24 = arith.constant dense<0xFF800000> : vector<16xf32>
    %55 = vector.multi_reduction <maximumf>, %54, %cst_24 [1] : vector<16x16xf32> to vector<16xf32>
    %56 = vector.shape_cast %55 : vector<16xf32> to vector<16x1xf32>
    %57 = vector.extract_strided_slice %42 {offsets = [2, 0], sizes = [1, 16], strides = [1, 1]} : vector<4x16xf32> to vector<1x16xf32>
    %58 = vector.broadcast %57 : vector<1x16xf32> to vector<16x16xf32>
    %59 = arith.mulf %0, %58 : vector<16x16xf32>
    %cst_25 = arith.constant 0xFF800000 : f32
    %60 = vector.broadcast %cst_25 : f32 to vector<16x16xf32>
    %61 = arith.select %13, %59, %60 : vector<16x16xi1>, vector<16x16xf32>
    %cst_26 = arith.constant dense<0xFF800000> : vector<16xf32>
    %62 = vector.multi_reduction <maximumf>, %61, %cst_26 [1] : vector<16x16xf32> to vector<16xf32>
    %63 = vector.shape_cast %62 : vector<16xf32> to vector<16x1xf32>
    %64 = vector.extract_strided_slice %42 {offsets = [3, 0], sizes = [1, 16], strides = [1, 1]} : vector<4x16xf32> to vector<1x16xf32>
    %65 = vector.broadcast %64 : vector<1x16xf32> to vector<16x16xf32>
    %66 = arith.mulf %0, %65 : vector<16x16xf32>
    %cst_27 = arith.constant 0xFF800000 : f32
    %67 = vector.broadcast %cst_27 : f32 to vector<16x16xf32>
    %68 = arith.select %13, %66, %67 : vector<16x16xi1>, vector<16x16xf32>
    %cst_28 = arith.constant dense<0xFF800000> : vector<16xf32>
    %69 = vector.multi_reduction <maximumf>, %68, %cst_28 [1] : vector<16x16xf32> to vector<16xf32>
    %70 = vector.shape_cast %69 : vector<16xf32> to vector<16x1xf32>
    %71 = tpu.concatenate %49, %56, %63, %70 in 1 : vector<16x1xf32>, vector<16x1xf32>, vector<16x1xf32>, vector<16x1xf32> -> vector<16x4xf32>
    %cst_29 = arith.constant 0.000000e+00 : f32
    %72 = vector.shape_cast %5 : vector<16x1xi1> to vector<16x1xi1>
    %73 = vector.broadcast %72 : vector<16x1xi1> to vector<16x4xi1>
    %74 = vector.broadcast %cst_29 : f32 to vector<16x4xf32>
    %75 = arith.select %73, %36, %74 : vector<16x4xi1>, vector<16x4xf32>
    %cst_30 = arith.constant 0.000000e+00 : f32
    %76 = vector.shape_cast %5 : vector<16x1xi1> to vector<16x1xi1>
    %77 = vector.broadcast %76 : vector<16x1xi1> to vector<16x4xi1>
    %78 = vector.broadcast %cst_30 : f32 to vector<16x4xf32>
    %79 = arith.select %77, %37, %78 : vector<16x4xi1>, vector<16x4xf32>
    %cst_31 = arith.constant 0.000000e+00 : f32
    %80 = vector.shape_cast %5 : vector<16x1xi1> to vector<16x1xi1>
    %81 = vector.broadcast %80 : vector<16x1xi1> to vector<16x4xi1>
    %82 = vector.broadcast %cst_31 : f32 to vector<16x4xf32>
    %83 = arith.select %81, %71, %82 : vector<16x4xi1>, vector<16x4xf32>
    %cst_32 = arith.constant 0.000000e+00 : f32
    %84 = vector.shape_cast %5 : vector<16x1xi1> to vector<16x1xi1>
    %85 = vector.broadcast %84 : vector<16x1xi1> to vector<16x4xi1>
    %86 = vector.broadcast %cst_32 : f32 to vector<16x4xf32>
    %87 = arith.select %85, %41, %86 : vector<16x4xi1>, vector<16x4xf32>
    %88 = tpu.concatenate %14, %75, %79, %83, %87 in 1 : vector<16x4xf32>, vector<16x4xf32>, vector<16x4xf32>, vector<16x4xf32>, vector<16x4xf32> -> vector<16x20xf32>
    %cst_33 = arith.constant dense<0.000000e+00> : vector<16x8xf32>
    %89 = tpu.matmul %88, %17, %cst_33 {dimension_numbers = #tpu.dot_dimension_numbers<[1], [0], [0], [1], [0, 0, 1, 1], [], []>} : vector<16x20xf32>, vector<20x8xf32>, vector<16x8xf32> -> vector<16x8xf32>
    %90 = vector.broadcast %18 : vector<1x8xf32> to vector<16x8xf32>
    %91 = arith.addf %89, %90 : vector<16x8xf32>
    %cst_34 = arith.constant 0.000000e+00 : f32
    %92 = vector.broadcast %cst_34 : f32 to vector<16x8xf32>
    %93 = arith.maximumf %91, %92 : vector<16x8xf32>
    %c0_35 = arith.constant 0 : index
    %c0_36 = arith.constant 0 : index
    %94 = vector.load %arg8[%c0_35, %c0_36] : memref<8x32xf32, #tpu.memory_space<vmem>>, vector<8x32xf32>
    %c0_37 = arith.constant 0 : index
    %c0_38 = arith.constant 0 : index
    %95 = vector.load %arg9[%c0_37, %c0_38] : memref<1x32xf32, #tpu.memory_space<vmem>>, vector<1x32xf32>
    %c0_39 = arith.constant 0 : index
    %c0_40 = arith.constant 0 : index
    %96 = vector.load %arg10[%c0_39, %c0_40] : memref<40x8xf32, #tpu.memory_space<vmem>>, vector<40x8xf32>
    %c0_41 = arith.constant 0 : index
    %c0_42 = arith.constant 0 : index
    %97 = vector.load %arg11[%c0_41, %c0_42] : memref<1x8xf32, #tpu.memory_space<vmem>>, vector<1x8xf32>
    %cst_43 = arith.constant dense<0.000000e+00> : vector<16x32xf32>
    %98 = tpu.matmul %93, %94, %cst_43 {dimension_numbers = #tpu.dot_dimension_numbers<[1], [0], [0], [1], [0, 0, 1, 1], [], []>} : vector<16x8xf32>, vector<8x32xf32>, vector<16x32xf32> -> vector<16x32xf32>
    %99 = vector.broadcast %95 : vector<1x32xf32> to vector<16x32xf32>
    %100 = arith.addf %98, %99 : vector<16x32xf32>
    %101 = vector.extract_strided_slice %100 {offsets = [0, 16], sizes = [16, 8], strides = [1, 1]} : vector<16x32xf32> to vector<16x8xf32>
    %102 = vector.extract_strided_slice %100 {offsets = [0, 24], sizes = [16, 8], strides = [1, 1]} : vector<16x32xf32> to vector<16x8xf32>
    %103 = vector.extract_strided_slice %100 {offsets = [0, 0], sizes = [16, 24], strides = [1, 1]} : vector<16x32xf32> to vector<16x24xf32>
    %104 = arith.mulf %101, %101 : vector<16x8xf32>
    %105 = tpu.concatenate %103, %104 in 1 : vector<16x24xf32>, vector<16x8xf32> -> vector<16x32xf32>
    %cst_44 = arith.constant dense<0.000000e+00> : vector<16x32xf32>
    %106 = tpu.matmul %0, %105, %cst_44 {dimension_numbers = #tpu.dot_dimension_numbers<[1], [0], [0], [1], [0, 0, 1, 1], [], []>} : vector<16x16xf32>, vector<16x32xf32>, vector<16x32xf32> -> vector<16x32xf32>
    %107 = tpu.iota {dimensions = array<i32: 1>} : vector<16x32xi32>
    %c8_i32 = arith.constant 8 : i32
    %108 = vector.broadcast %c8_i32 : i32 to vector<16x32xi32>
    %109 = arith.cmpi slt, %107, %108 : vector<16x32xi32>
    %cst_45 = arith.constant 1.000000e+00 : f32
    %110 = vector.broadcast %cst_45 : f32 to vector<16x32xf32>
    %111 = vector.shape_cast %11 : vector<16x1xf32> to vector<16x1xf32>
    %112 = vector.broadcast %111 : vector<16x1xf32> to vector<16x32xf32>
    %113 = arith.select %109, %110, %112 : vector<16x32xi1>, vector<16x32xf32>
    %114 = arith.mulf %106, %113 : vector<16x32xf32>
    %115 = vector.extract_strided_slice %114 {offsets = [0, 0], sizes = [16, 8], strides = [1, 1]} : vector<16x32xf32> to vector<16x8xf32>
    %116 = vector.extract_strided_slice %114 {offsets = [0, 8], sizes = [16, 8], strides = [1, 1]} : vector<16x32xf32> to vector<16x8xf32>
    %117 = vector.extract_strided_slice %114 {offsets = [0, 16], sizes = [16, 8], strides = [1, 1]} : vector<16x32xf32> to vector<16x8xf32>
    %118 = vector.extract_strided_slice %114 {offsets = [0, 24], sizes = [16, 8], strides = [1, 1]} : vector<16x32xf32> to vector<16x8xf32>
    %119 = arith.mulf %117, %117 : vector<16x8xf32>
    %120 = arith.subf %118, %119 : vector<16x8xf32>
    %121 = tpu.transpose %102, [1, 0] : vector<16x8xf32> -> vector<8x16xf32>
    %122 = vector.extract_strided_slice %121 {offsets = [0, 0], sizes = [1, 16], strides = [1, 1]} : vector<8x16xf32> to vector<1x16xf32>
    %123 = vector.broadcast %122 : vector<1x16xf32> to vector<16x16xf32>
    %124 = arith.mulf %0, %123 : vector<16x16xf32>
    %cst_46 = arith.constant 0xFF800000 : f32
    %125 = vector.broadcast %cst_46 : f32 to vector<16x16xf32>
    %126 = arith.select %13, %124, %125 : vector<16x16xi1>, vector<16x16xf32>
    %cst_47 = arith.constant dense<0xFF800000> : vector<16xf32>
    %127 = vector.multi_reduction <maximumf>, %126, %cst_47 [1] : vector<16x16xf32> to vector<16xf32>
    %128 = vector.shape_cast %127 : vector<16xf32> to vector<16x1xf32>
    %129 = vector.extract_strided_slice %121 {offsets = [1, 0], sizes = [1, 16], strides = [1, 1]} : vector<8x16xf32> to vector<1x16xf32>
    %130 = vector.broadcast %129 : vector<1x16xf32> to vector<16x16xf32>
    %131 = arith.mulf %0, %130 : vector<16x16xf32>
    %cst_48 = arith.constant 0xFF800000 : f32
    %132 = vector.broadcast %cst_48 : f32 to vector<16x16xf32>
    %133 = arith.select %13, %131, %132 : vector<16x16xi1>, vector<16x16xf32>
    %cst_49 = arith.constant dense<0xFF800000> : vector<16xf32>
    %134 = vector.multi_reduction <maximumf>, %133, %cst_49 [1] : vector<16x16xf32> to vector<16xf32>
    %135 = vector.shape_cast %134 : vector<16xf32> to vector<16x1xf32>
    %136 = vector.extract_strided_slice %121 {offsets = [2, 0], sizes = [1, 16], strides = [1, 1]} : vector<8x16xf32> to vector<1x16xf32>
    %137 = vector.broadcast %136 : vector<1x16xf32> to vector<16x16xf32>
    %138 = arith.mulf %0, %137 : vector<16x16xf32>
    %cst_50 = arith.constant 0xFF800000 : f32
    %139 = vector.broadcast %cst_50 : f32 to vector<16x16xf32>
    %140 = arith.select %13, %138, %139 : vector<16x16xi1>, vector<16x16xf32>
    %cst_51 = arith.constant dense<0xFF800000> : vector<16xf32>
    %141 = vector.multi_reduction <maximumf>, %140, %cst_51 [1] : vector<16x16xf32> to vector<16xf32>
    %142 = vector.shape_cast %141 : vector<16xf32> to vector<16x1xf32>
    %143 = vector.extract_strided_slice %121 {offsets = [3, 0], sizes = [1, 16], strides = [1, 1]} : vector<8x16xf32> to vector<1x16xf32>
    %144 = vector.broadcast %143 : vector<1x16xf32> to vector<16x16xf32>
    %145 = arith.mulf %0, %144 : vector<16x16xf32>
    %cst_52 = arith.constant 0xFF800000 : f32
    %146 = vector.broadcast %cst_52 : f32 to vector<16x16xf32>
    %147 = arith.select %13, %145, %146 : vector<16x16xi1>, vector<16x16xf32>
    %cst_53 = arith.constant dense<0xFF800000> : vector<16xf32>
    %148 = vector.multi_reduction <maximumf>, %147, %cst_53 [1] : vector<16x16xf32> to vector<16xf32>
    %149 = vector.shape_cast %148 : vector<16xf32> to vector<16x1xf32>
    %150 = vector.extract_strided_slice %121 {offsets = [4, 0], sizes = [1, 16], strides = [1, 1]} : vector<8x16xf32> to vector<1x16xf32>
    %151 = vector.broadcast %150 : vector<1x16xf32> to vector<16x16xf32>
    %152 = arith.mulf %0, %151 : vector<16x16xf32>
    %cst_54 = arith.constant 0xFF800000 : f32
    %153 = vector.broadcast %cst_54 : f32 to vector<16x16xf32>
    %154 = arith.select %13, %152, %153 : vector<16x16xi1>, vector<16x16xf32>
    %cst_55 = arith.constant dense<0xFF800000> : vector<16xf32>
    %155 = vector.multi_reduction <maximumf>, %154, %cst_55 [1] : vector<16x16xf32> to vector<16xf32>
    %156 = vector.shape_cast %155 : vector<16xf32> to vector<16x1xf32>
    %157 = vector.extract_strided_slice %121 {offsets = [5, 0], sizes = [1, 16], strides = [1, 1]} : vector<8x16xf32> to vector<1x16xf32>
    %158 = vector.broadcast %157 : vector<1x16xf32> to vector<16x16xf32>
    %159 = arith.mulf %0, %158 : vector<16x16xf32>
    %cst_56 = arith.constant 0xFF800000 : f32
    %160 = vector.broadcast %cst_56 : f32 to vector<16x16xf32>
    %161 = arith.select %13, %159, %160 : vector<16x16xi1>, vector<16x16xf32>
    %cst_57 = arith.constant dense<0xFF800000> : vector<16xf32>
    %162 = vector.multi_reduction <maximumf>, %161, %cst_57 [1] : vector<16x16xf32> to vector<16xf32>
    %163 = vector.shape_cast %162 : vector<16xf32> to vector<16x1xf32>
    %164 = vector.extract_strided_slice %121 {offsets = [6, 0], sizes = [1, 16], strides = [1, 1]} : vector<8x16xf32> to vector<1x16xf32>
    %165 = vector.broadcast %164 : vector<1x16xf32> to vector<16x16xf32>
    %166 = arith.mulf %0, %165 : vector<16x16xf32>
    %cst_58 = arith.constant 0xFF800000 : f32
    %167 = vector.broadcast %cst_58 : f32 to vector<16x16xf32>
    %168 = arith.select %13, %166, %167 : vector<16x16xi1>, vector<16x16xf32>
    %cst_59 = arith.constant dense<0xFF800000> : vector<16xf32>
    %169 = vector.multi_reduction <maximumf>, %168, %cst_59 [1] : vector<16x16xf32> to vector<16xf32>
    %170 = vector.shape_cast %169 : vector<16xf32> to vector<16x1xf32>
    %171 = vector.extract_strided_slice %121 {offsets = [7, 0], sizes = [1, 16], strides = [1, 1]} : vector<8x16xf32> to vector<1x16xf32>
    %172 = vector.broadcast %171 : vector<1x16xf32> to vector<16x16xf32>
    %173 = arith.mulf %0, %172 : vector<16x16xf32>
    %cst_60 = arith.constant 0xFF800000 : f32
    %174 = vector.broadcast %cst_60 : f32 to vector<16x16xf32>
    %175 = arith.select %13, %173, %174 : vector<16x16xi1>, vector<16x16xf32>
    %cst_61 = arith.constant dense<0xFF800000> : vector<16xf32>
    %176 = vector.multi_reduction <maximumf>, %175, %cst_61 [1] : vector<16x16xf32> to vector<16xf32>
    %177 = vector.shape_cast %176 : vector<16xf32> to vector<16x1xf32>
    %178 = tpu.concatenate %128, %135, %142, %149, %156, %163, %170, %177 in 1 : vector<16x1xf32>, vector<16x1xf32>, vector<16x1xf32>, vector<16x1xf32>, vector<16x1xf32>, vector<16x1xf32>, vector<16x1xf32>, vector<16x1xf32> -> vector<16x8xf32>
    %cst_62 = arith.constant 0.000000e+00 : f32
    %179 = vector.shape_cast %5 : vector<16x1xi1> to vector<16x1xi1>
    %180 = vector.broadcast %179 : vector<16x1xi1> to vector<16x8xi1>
    %181 = vector.broadcast %cst_62 : f32 to vector<16x8xf32>
    %182 = arith.select %180, %115, %181 : vector<16x8xi1>, vector<16x8xf32>
    %cst_63 = arith.constant 0.000000e+00 : f32
    %183 = vector.shape_cast %5 : vector<16x1xi1> to vector<16x1xi1>
    %184 = vector.broadcast %183 : vector<16x1xi1> to vector<16x8xi1>
    %185 = vector.broadcast %cst_63 : f32 to vector<16x8xf32>
    %186 = arith.select %184, %116, %185 : vector<16x8xi1>, vector<16x8xf32>
    %cst_64 = arith.constant 0.000000e+00 : f32
    %187 = vector.shape_cast %5 : vector<16x1xi1> to vector<16x1xi1>
    %188 = vector.broadcast %187 : vector<16x1xi1> to vector<16x8xi1>
    %189 = vector.broadcast %cst_64 : f32 to vector<16x8xf32>
    %190 = arith.select %188, %178, %189 : vector<16x8xi1>, vector<16x8xf32>
    %cst_65 = arith.constant 0.000000e+00 : f32
    %191 = vector.shape_cast %5 : vector<16x1xi1> to vector<16x1xi1>
    %192 = vector.broadcast %191 : vector<16x1xi1> to vector<16x8xi1>
    %193 = vector.broadcast %cst_65 : f32 to vector<16x8xf32>
    %194 = arith.select %192, %120, %193 : vector<16x8xi1>, vector<16x8xf32>
    %195 = tpu.concatenate %93, %182, %186, %190, %194 in 1 : vector<16x8xf32>, vector<16x8xf32>, vector<16x8xf32>, vector<16x8xf32>, vector<16x8xf32> -> vector<16x40xf32>
    %cst_66 = arith.constant dense<0.000000e+00> : vector<16x8xf32>
    %196 = tpu.matmul %195, %96, %cst_66 {dimension_numbers = #tpu.dot_dimension_numbers<[1], [0], [0], [1], [0, 0, 1, 1], [], []>} : vector<16x40xf32>, vector<40x8xf32>, vector<16x8xf32> -> vector<16x8xf32>
    %197 = vector.broadcast %97 : vector<1x8xf32> to vector<16x8xf32>
    %198 = arith.addf %196, %197 : vector<16x8xf32>
    %cst_67 = arith.constant 0.000000e+00 : f32
    %199 = vector.broadcast %cst_67 : f32 to vector<16x8xf32>
    %200 = arith.maximumf %198, %199 : vector<16x8xf32>
    %c0_68 = arith.constant 0 : index
    %c0_69 = arith.constant 0 : index
    %201 = vector.load %arg12[%c0_68, %c0_69] : memref<8x32xf32, #tpu.memory_space<vmem>>, vector<8x32xf32>
    %c0_70 = arith.constant 0 : index
    %c0_71 = arith.constant 0 : index
    %202 = vector.load %arg13[%c0_70, %c0_71] : memref<1x32xf32, #tpu.memory_space<vmem>>, vector<1x32xf32>
    %c0_72 = arith.constant 0 : index
    %c0_73 = arith.constant 0 : index
    %203 = vector.load %arg14[%c0_72, %c0_73] : memref<40x1xf32, #tpu.memory_space<vmem>>, vector<40x1xf32>
    %c0_74 = arith.constant 0 : index
    %c0_75 = arith.constant 0 : index
    %204 = vector.load %arg15[%c0_74, %c0_75] : memref<1x1xf32, #tpu.memory_space<vmem>>, vector<1x1xf32>
    %cst_76 = arith.constant dense<0.000000e+00> : vector<16x32xf32>
    %205 = tpu.matmul %200, %201, %cst_76 {dimension_numbers = #tpu.dot_dimension_numbers<[1], [0], [0], [1], [0, 0, 1, 1], [], []>} : vector<16x8xf32>, vector<8x32xf32>, vector<16x32xf32> -> vector<16x32xf32>
    %206 = vector.broadcast %202 : vector<1x32xf32> to vector<16x32xf32>
    %207 = arith.addf %205, %206 : vector<16x32xf32>
    %208 = vector.extract_strided_slice %207 {offsets = [0, 16], sizes = [16, 8], strides = [1, 1]} : vector<16x32xf32> to vector<16x8xf32>
    %209 = vector.extract_strided_slice %207 {offsets = [0, 24], sizes = [16, 8], strides = [1, 1]} : vector<16x32xf32> to vector<16x8xf32>
    %210 = vector.extract_strided_slice %207 {offsets = [0, 0], sizes = [16, 24], strides = [1, 1]} : vector<16x32xf32> to vector<16x24xf32>
    %211 = arith.mulf %208, %208 : vector<16x8xf32>
    %212 = tpu.concatenate %210, %211 in 1 : vector<16x24xf32>, vector<16x8xf32> -> vector<16x32xf32>
    %cst_77 = arith.constant dense<0.000000e+00> : vector<16x32xf32>
    %213 = tpu.matmul %0, %212, %cst_77 {dimension_numbers = #tpu.dot_dimension_numbers<[1], [0], [0], [1], [0, 0, 1, 1], [], []>} : vector<16x16xf32>, vector<16x32xf32>, vector<16x32xf32> -> vector<16x32xf32>
    %214 = tpu.iota {dimensions = array<i32: 1>} : vector<16x32xi32>
    %c8_i32_78 = arith.constant 8 : i32
    %215 = vector.broadcast %c8_i32_78 : i32 to vector<16x32xi32>
    %216 = arith.cmpi slt, %214, %215 : vector<16x32xi32>
    %cst_79 = arith.constant 1.000000e+00 : f32
    %217 = vector.broadcast %cst_79 : f32 to vector<16x32xf32>
    %218 = vector.shape_cast %11 : vector<16x1xf32> to vector<16x1xf32>
    %219 = vector.broadcast %218 : vector<16x1xf32> to vector<16x32xf32>
    %220 = arith.select %216, %217, %219 : vector<16x32xi1>, vector<16x32xf32>
    %221 = arith.mulf %213, %220 : vector<16x32xf32>
    %222 = vector.extract_strided_slice %221 {offsets = [0, 0], sizes = [16, 8], strides = [1, 1]} : vector<16x32xf32> to vector<16x8xf32>
    %223 = vector.extract_strided_slice %221 {offsets = [0, 8], sizes = [16, 8], strides = [1, 1]} : vector<16x32xf32> to vector<16x8xf32>
    %224 = vector.extract_strided_slice %221 {offsets = [0, 16], sizes = [16, 8], strides = [1, 1]} : vector<16x32xf32> to vector<16x8xf32>
    %225 = vector.extract_strided_slice %221 {offsets = [0, 24], sizes = [16, 8], strides = [1, 1]} : vector<16x32xf32> to vector<16x8xf32>
    %226 = arith.mulf %224, %224 : vector<16x8xf32>
    %227 = arith.subf %225, %226 : vector<16x8xf32>
    %228 = tpu.transpose %209, [1, 0] : vector<16x8xf32> -> vector<8x16xf32>
    %229 = vector.extract_strided_slice %228 {offsets = [0, 0], sizes = [1, 16], strides = [1, 1]} : vector<8x16xf32> to vector<1x16xf32>
    %230 = vector.broadcast %229 : vector<1x16xf32> to vector<16x16xf32>
    %231 = arith.mulf %0, %230 : vector<16x16xf32>
    %cst_80 = arith.constant 0xFF800000 : f32
    %232 = vector.broadcast %cst_80 : f32 to vector<16x16xf32>
    %233 = arith.select %13, %231, %232 : vector<16x16xi1>, vector<16x16xf32>
    %cst_81 = arith.constant dense<0xFF800000> : vector<16xf32>
    %234 = vector.multi_reduction <maximumf>, %233, %cst_81 [1] : vector<16x16xf32> to vector<16xf32>
    %235 = vector.shape_cast %234 : vector<16xf32> to vector<16x1xf32>
    %236 = vector.extract_strided_slice %228 {offsets = [1, 0], sizes = [1, 16], strides = [1, 1]} : vector<8x16xf32> to vector<1x16xf32>
    %237 = vector.broadcast %236 : vector<1x16xf32> to vector<16x16xf32>
    %238 = arith.mulf %0, %237 : vector<16x16xf32>
    %cst_82 = arith.constant 0xFF800000 : f32
    %239 = vector.broadcast %cst_82 : f32 to vector<16x16xf32>
    %240 = arith.select %13, %238, %239 : vector<16x16xi1>, vector<16x16xf32>
    %cst_83 = arith.constant dense<0xFF800000> : vector<16xf32>
    %241 = vector.multi_reduction <maximumf>, %240, %cst_83 [1] : vector<16x16xf32> to vector<16xf32>
    %242 = vector.shape_cast %241 : vector<16xf32> to vector<16x1xf32>
    %243 = vector.extract_strided_slice %228 {offsets = [2, 0], sizes = [1, 16], strides = [1, 1]} : vector<8x16xf32> to vector<1x16xf32>
    %244 = vector.broadcast %243 : vector<1x16xf32> to vector<16x16xf32>
    %245 = arith.mulf %0, %244 : vector<16x16xf32>
    %cst_84 = arith.constant 0xFF800000 : f32
    %246 = vector.broadcast %cst_84 : f32 to vector<16x16xf32>
    %247 = arith.select %13, %245, %246 : vector<16x16xi1>, vector<16x16xf32>
    %cst_85 = arith.constant dense<0xFF800000> : vector<16xf32>
    %248 = vector.multi_reduction <maximumf>, %247, %cst_85 [1] : vector<16x16xf32> to vector<16xf32>
    %249 = vector.shape_cast %248 : vector<16xf32> to vector<16x1xf32>
    %250 = vector.extract_strided_slice %228 {offsets = [3, 0], sizes = [1, 16], strides = [1, 1]} : vector<8x16xf32> to vector<1x16xf32>
    %251 = vector.broadcast %250 : vector<1x16xf32> to vector<16x16xf32>
    %252 = arith.mulf %0, %251 : vector<16x16xf32>
    %cst_86 = arith.constant 0xFF800000 : f32
    %253 = vector.broadcast %cst_86 : f32 to vector<16x16xf32>
    %254 = arith.select %13, %252, %253 : vector<16x16xi1>, vector<16x16xf32>
    %cst_87 = arith.constant dense<0xFF800000> : vector<16xf32>
    %255 = vector.multi_reduction <maximumf>, %254, %cst_87 [1] : vector<16x16xf32> to vector<16xf32>
    %256 = vector.shape_cast %255 : vector<16xf32> to vector<16x1xf32>
    %257 = vector.extract_strided_slice %228 {offsets = [4, 0], sizes = [1, 16], strides = [1, 1]} : vector<8x16xf32> to vector<1x16xf32>
    %258 = vector.broadcast %257 : vector<1x16xf32> to vector<16x16xf32>
    %259 = arith.mulf %0, %258 : vector<16x16xf32>
    %cst_88 = arith.constant 0xFF800000 : f32
    %260 = vector.broadcast %cst_88 : f32 to vector<16x16xf32>
    %261 = arith.select %13, %259, %260 : vector<16x16xi1>, vector<16x16xf32>
    %cst_89 = arith.constant dense<0xFF800000> : vector<16xf32>
    %262 = vector.multi_reduction <maximumf>, %261, %cst_89 [1] : vector<16x16xf32> to vector<16xf32>
    %263 = vector.shape_cast %262 : vector<16xf32> to vector<16x1xf32>
    %264 = vector.extract_strided_slice %228 {offsets = [5, 0], sizes = [1, 16], strides = [1, 1]} : vector<8x16xf32> to vector<1x16xf32>
    %265 = vector.broadcast %264 : vector<1x16xf32> to vector<16x16xf32>
    %266 = arith.mulf %0, %265 : vector<16x16xf32>
    %cst_90 = arith.constant 0xFF800000 : f32
    %267 = vector.broadcast %cst_90 : f32 to vector<16x16xf32>
    %268 = arith.select %13, %266, %267 : vector<16x16xi1>, vector<16x16xf32>
    %cst_91 = arith.constant dense<0xFF800000> : vector<16xf32>
    %269 = vector.multi_reduction <maximumf>, %268, %cst_91 [1] : vector<16x16xf32> to vector<16xf32>
    %270 = vector.shape_cast %269 : vector<16xf32> to vector<16x1xf32>
    %271 = vector.extract_strided_slice %228 {offsets = [6, 0], sizes = [1, 16], strides = [1, 1]} : vector<8x16xf32> to vector<1x16xf32>
    %272 = vector.broadcast %271 : vector<1x16xf32> to vector<16x16xf32>
    %273 = arith.mulf %0, %272 : vector<16x16xf32>
    %cst_92 = arith.constant 0xFF800000 : f32
    %274 = vector.broadcast %cst_92 : f32 to vector<16x16xf32>
    %275 = arith.select %13, %273, %274 : vector<16x16xi1>, vector<16x16xf32>
    %cst_93 = arith.constant dense<0xFF800000> : vector<16xf32>
    %276 = vector.multi_reduction <maximumf>, %275, %cst_93 [1] : vector<16x16xf32> to vector<16xf32>
    %277 = vector.shape_cast %276 : vector<16xf32> to vector<16x1xf32>
    %278 = vector.extract_strided_slice %228 {offsets = [7, 0], sizes = [1, 16], strides = [1, 1]} : vector<8x16xf32> to vector<1x16xf32>
    %279 = vector.broadcast %278 : vector<1x16xf32> to vector<16x16xf32>
    %280 = arith.mulf %0, %279 : vector<16x16xf32>
    %cst_94 = arith.constant 0xFF800000 : f32
    %281 = vector.broadcast %cst_94 : f32 to vector<16x16xf32>
    %282 = arith.select %13, %280, %281 : vector<16x16xi1>, vector<16x16xf32>
    %cst_95 = arith.constant dense<0xFF800000> : vector<16xf32>
    %283 = vector.multi_reduction <maximumf>, %282, %cst_95 [1] : vector<16x16xf32> to vector<16xf32>
    %284 = vector.shape_cast %283 : vector<16xf32> to vector<16x1xf32>
    %285 = tpu.concatenate %235, %242, %249, %256, %263, %270, %277, %284 in 1 : vector<16x1xf32>, vector<16x1xf32>, vector<16x1xf32>, vector<16x1xf32>, vector<16x1xf32>, vector<16x1xf32>, vector<16x1xf32>, vector<16x1xf32> -> vector<16x8xf32>
    %cst_96 = arith.constant 0.000000e+00 : f32
    %286 = vector.shape_cast %5 : vector<16x1xi1> to vector<16x1xi1>
    %287 = vector.broadcast %286 : vector<16x1xi1> to vector<16x8xi1>
    %288 = vector.broadcast %cst_96 : f32 to vector<16x8xf32>
    %289 = arith.select %287, %222, %288 : vector<16x8xi1>, vector<16x8xf32>
    %cst_97 = arith.constant 0.000000e+00 : f32
    %290 = vector.shape_cast %5 : vector<16x1xi1> to vector<16x1xi1>
    %291 = vector.broadcast %290 : vector<16x1xi1> to vector<16x8xi1>
    %292 = vector.broadcast %cst_97 : f32 to vector<16x8xf32>
    %293 = arith.select %291, %223, %292 : vector<16x8xi1>, vector<16x8xf32>
    %cst_98 = arith.constant 0.000000e+00 : f32
    %294 = vector.shape_cast %5 : vector<16x1xi1> to vector<16x1xi1>
    %295 = vector.broadcast %294 : vector<16x1xi1> to vector<16x8xi1>
    %296 = vector.broadcast %cst_98 : f32 to vector<16x8xf32>
    %297 = arith.select %295, %285, %296 : vector<16x8xi1>, vector<16x8xf32>
    %cst_99 = arith.constant 0.000000e+00 : f32
    %298 = vector.shape_cast %5 : vector<16x1xi1> to vector<16x1xi1>
    %299 = vector.broadcast %298 : vector<16x1xi1> to vector<16x8xi1>
    %300 = vector.broadcast %cst_99 : f32 to vector<16x8xf32>
    %301 = arith.select %299, %227, %300 : vector<16x8xi1>, vector<16x8xf32>
    %302 = tpu.concatenate %200, %289, %293, %297, %301 in 1 : vector<16x8xf32>, vector<16x8xf32>, vector<16x8xf32>, vector<16x8xf32>, vector<16x8xf32> -> vector<16x40xf32>
    %cst_100 = arith.constant dense<0.000000e+00> : vector<16x1xf32>
    %303 = tpu.matmul %302, %203, %cst_100 {dimension_numbers = #tpu.dot_dimension_numbers<[1], [0], [0], [1], [0, 0, 1, 1], [], []>} : vector<16x40xf32>, vector<40x1xf32>, vector<16x1xf32> -> vector<16x1xf32>
    %304 = vector.broadcast %204 : vector<1x1xf32> to vector<16x1xf32>
    %305 = arith.addf %303, %304 : vector<16x1xf32>
    %cst_101 = arith.constant 0.000000e+00 : f32
    %306 = vector.broadcast %cst_101 : f32 to vector<16x1xf32>
    %307 = arith.maximumf %305, %306 : vector<16x1xf32>
    %c0_102 = arith.constant 0 : index
    %c0_103 = arith.constant 0 : index
    %308 = vector.load %arg1[%c0_102, %c0_103] : memref<16x4xf32, #tpu.memory_space<vmem>>, vector<16x4xf32>
    %309 = vector.extract_strided_slice %308 {offsets = [0, 3], sizes = [16, 1], strides = [1, 1]} : vector<16x4xf32> to vector<16x1xf32>
    %310 = arith.addf %309, %307 : vector<16x1xf32>
    %cst_104 = arith.constant 0.000000e+00 : f32
    %cst_105 = arith.constant 1.000000e+00 : f32
    %311 = vector.broadcast %cst_104 : f32 to vector<16x1xf32>
    %312 = arith.maximumf %311, %310 : vector<16x1xf32>
    %313 = vector.broadcast %cst_105 : f32 to vector<16x1xf32>
    %314 = arith.minimumf %313, %312 : vector<16x1xf32>
    %c0_106 = arith.constant 0 : index
    %c0_107 = arith.constant 0 : index
    %315 = vector.load %arg16[%c0_106, %c0_107] : memref<16x1xf32, #tpu.memory_space<vmem>>, vector<16x1xf32>
    tpu.vector_store %arg16[%c0_106, %c0_107], %314 {strides = array<i32>} : memref<16x1xf32, #tpu.memory_space<vmem>>, vector<16x1xf32>,
    return
  }
  func.func @transform_0(%arg0: i32) -> (i32, i32) {
    %c0_i32 = arith.constant 0 : i32
    %c0_i32_0 = arith.constant 0 : i32
    %c0_i32_1 = arith.constant 0 : i32
    return %c0_i32, %c0_i32_0 : i32, i32
  }
  func.func @transform_1(%arg0: i32) -> (i32, i32) {
    %c0_i32 = arith.constant 0 : i32
    %c0_i32_0 = arith.constant 0 : i32
    %c0_i32_1 = arith.constant 0 : i32
    return %c0_i32, %c0_i32_0 : i32, i32
  }
  func.func @transform_2(%arg0: i32) -> (i32, i32) {
    %c0_i32 = arith.constant 0 : i32
    %c0_i32_0 = arith.constant 0 : i32
    %c0_i32_1 = arith.constant 0 : i32
    return %c0_i32, %c0_i32_0 : i32, i32
  }
  func.func @transform_3(%arg0: i32) -> (i32, i32) {
    %c0_i32 = arith.constant 0 : i32
    %c0_i32_0 = arith.constant 0 : i32
    %c0_i32_1 = arith.constant 0 : i32
    return %c0_i32, %c0_i32_0 : i32, i32
  }
  func.func @transform_4(%arg0: i32) -> (i32, i32) {
    %c0_i32 = arith.constant 0 : i32
    %c0_i32_0 = arith.constant 0 : i32
    %c0_i32_1 = arith.constant 0 : i32
    return %c0_i32, %c0_i32_0 : i32, i32
  }
  func.func @transform_5(%arg0: i32) -> (i32, i32) {
    %c0_i32 = arith.constant 0 : i32
    %c0_i32_0 = arith.constant 0 : i32
    %c0_i32_1 = arith.constant 0 : i32
    return %c0_i32, %c0_i32_0 : i32, i32
  }
  func.func @transform_6(%arg0: i32) -> (i32, i32) {
    %c0_i32 = arith.constant 0 : i32
    %c0_i32_0 = arith.constant 0 : i32
    %c0_i32_1 = arith.constant 0 : i32
    return %c0_i32, %c0_i32_0 : i32, i32
  }
  func.func @transform_7(%arg0: i32) -> (i32, i32) {
    %c0_i32 = arith.constant 0 : i32
    %c0_i32_0 = arith.constant 0 : i32
    %c0_i32_1 = arith.constant 0 : i32
    return %c0_i32, %c0_i32_0 : i32, i32
  }
  func.func @transform_8(%arg0: i32) -> (i32, i32) {
    %c0_i32 = arith.constant 0 : i32
    %c0_i32_0 = arith.constant 0 : i32
    %c0_i32_1 = arith.constant 0 : i32
    return %c0_i32, %c0_i32_0 : i32, i32
  }
  func.func @transform_9(%arg0: i32) -> (i32, i32) {
    %c0_i32 = arith.constant 0 : i32
    %c0_i32_0 = arith.constant 0 : i32
    %c0_i32_1 = arith.constant 0 : i32
    return %c0_i32, %c0_i32_0 : i32, i32
  }
  func.func @transform_10(%arg0: i32) -> (i32, i32) {
    %c0_i32 = arith.constant 0 : i32
    %c0_i32_0 = arith.constant 0 : i32
    %c0_i32_1 = arith.constant 0 : i32
    return %c0_i32, %c0_i32_0 : i32, i32
  }
  func.func @transform_11(%arg0: i32) -> (i32, i32) {
    %c0_i32 = arith.constant 0 : i32
    %c0_i32_0 = arith.constant 0 : i32
    %c0_i32_1 = arith.constant 0 : i32
    return %c0_i32, %c0_i32_0 : i32, i32
  }
  func.func @transform_12(%arg0: i32) -> (i32, i32) {
    %c0_i32 = arith.constant 0 : i32
    %c0_i32_0 = arith.constant 0 : i32
    %c0_i32_1 = arith.constant 0 : i32
    return %c0_i32, %c0_i32_0 : i32, i32
  }
  func.func @transform_13(%arg0: i32) -> (i32, i32) {
    %c0_i32 = arith.constant 0 : i32
    %c0_i32_0 = arith.constant 0 : i32
    %c0_i32_1 = arith.constant 0 : i32
    return %c0_i32, %c0_i32_0 : i32, i32
  }
  func.func @transform_14(%arg0: i32) -> (i32, i32) {
    %c0_i32 = arith.constant 0 : i32
    %c0_i32_0 = arith.constant 0 : i32
    %c0_i32_1 = arith.constant 0 : i32
    return %c0_i32, %c0_i32_0 : i32, i32
  }
  func.func @transform_15(%arg0: i32) -> (i32, i32) {
    %c0_i32 = arith.constant 0 : i32
    %c0_i32_0 = arith.constant 0 : i32
    %c0_i32_1 = arith.constant 0 : i32
    return %c0_i32, %c0_i32_0 : i32, i32
  }
}

</mosaic_0001>

<llo_original>
// kernel: monstor_forward.1
$region0: #{monstor_forward.1}
  #allocation0 [shape = 'u32[]', space=smem, size = 0x4, offset = 0x4, fixed_abs, tag = 'smem constant byte address 0x4 - core index']
  #allocation1 [shape = 'u32[144,128]{1,0:T(1,128)}', space=vmem, size = 0x12000, scoped, tag = 'internal scratch']
  #allocation2 [shape = 'f32[1,1]{1,0:T(1,128)S(1)}', space=vmem, size = 0x200, scoped, tag = 'scoped memory for monstor_forward.1']
  %s0 = inlined_call_operand.vmem [shape: f32[16,4], index: 0, kind: input, shape index: {}]
  %s1 = inlined_call_operand.vmem [shape: f32[16,16], index: 1, kind: input, shape index: {}]
  %s2 = inlined_call_operand.vmem [shape: f32[16,16], index: 2, kind: input, shape index: {}]
  %s3 = inlined_call_operand.vmem [shape: f32[4,16], index: 3, kind: input, shape index: {}]
  %s4 = inlined_call_operand.vmem [shape: f32[1,16], index: 4, kind: input, shape index: {}]
  %s5 = inlined_call_operand.vmem [shape: f32[20,8], index: 5, kind: input, shape index: {}]
  %s6 = inlined_call_operand.vmem [shape: f32[1,8], index: 6, kind: input, shape index: {}]
  %s7 = inlined_call_operand.vmem [shape: f32[8,32], index: 7, kind: input, shape index: {}]
  %s8 = inlined_call_operand.vmem [shape: f32[1,32], index: 8, kind: input, shape index: {}]
  %s9 = inlined_call_operand.vmem [shape: f32[40,8], index: 9, kind: input, shape index: {}]
  %s10 = inlined_call_operand.vmem [shape: f32[1,8], index: 10, kind: input, shape index: {}]
  %s11 = inlined_call_operand.vmem [shape: f32[8,32], index: 11, kind: input, shape index: {}]
  %s12 = inlined_call_operand.vmem [shape: f32[1,32], index: 12, kind: input, shape index: {}]
  %s13 = inlined_call_operand.vmem [shape: f32[40,1], index: 13, kind: input, shape index: {}]
  %s14 = inlined_call_operand.<no memory space> [shape: f32[1,1], index: 14, kind: input, shape index: {}]
  %s15 = inlined_call_operand.vmem [shape: f32[16,1], index: 15, kind: output, shape index: {}]
  %s16 = sld [smem:[#allocation0]]
  $region70: #{monstor_forward.1} parent=0
    _
  %s18 = ssub.s32 1, %s16
  %s19 = scalar_select 0, %s18, %s16
  %v20 = vstv %s14
  %21 = vst [vmem:[#allocation2] sm:$0x1] %v20
  // Predicated region
  $region2: #{monstor_forward.1} parent=0 // pred_check
    _
  $region3: #{monstor_forward.1} parent=0 // pred_check_branch
    %23 = sbr.rel (0) target = $region5
  $region4: #{monstor_forward.1} parent=0 // pred_region
    _
  $region5: #{monstor_forward.1} parent=0 // pred_fallthru
    _
  // Predicated region
  $region6: #{monstor_forward.1} parent=0 // pred_check
    _
  $region7: #{monstor_forward.1} parent=0 // pred_check_branch
    %25 = sbr.rel (0) target = $region9
  $region8: #{monstor_forward.1} parent=0 // pred_region
    _
  $region9: #{monstor_forward.1} parent=0 // pred_fallthru
    _
  // Predicated region
  $region10: #{monstor_forward.1} parent=0 // pred_check
    _
  $region11: #{monstor_forward.1} parent=0 // pred_check_branch
    %27 = sbr.rel (0) target = $region13
  $region12: #{monstor_forward.1} parent=0 // pred_region
    _
  $region13: #{monstor_forward.1} parent=0 // pred_fallthru
    _
  // Predicated region
  $region14: #{monstor_forward.1} parent=0 // pred_check
    _
  $region15: #{monstor_forward.1} parent=0 // pred_check_branch
    %29 = sbr.rel (0) target = $region17
  $region16: #{monstor_forward.1} parent=0 // pred_region
    _
  $region17: #{monstor_forward.1} parent=0 // pred_fallthru
    _
  // Predicated region
  $region18: #{monstor_forward.1} parent=0 // pred_check
    _
  $region19: #{monstor_forward.1} parent=0 // pred_check_branch
    %31 = sbr.rel (0) target = $region21
  $region20: #{monstor_forward.1} parent=0 // pred_region
    _
  $region21: #{monstor_forward.1} parent=0 // pred_fallthru
    _
  // Predicated region
  $region22: #{monstor_forward.1} parent=0 // pred_check
    _
  $region23: #{monstor_forward.1} parent=0 // pred_check_branch
    %33 = sbr.rel (0) target = $region25
  $region24: #{monstor_forward.1} parent=0 // pred_region
    _
  $region25: #{monstor_forward.1} parent=0 // pred_fallthru
    _
  // Predicated region
  $region26: #{monstor_forward.1} parent=0 // pred_check
    _
  $region27: #{monstor_forward.1} parent=0 // pred_check_branch
    %35 = sbr.rel (0) target = $region29
  $region28: #{monstor_forward.1} parent=0 // pred_region
    _
  $region29: #{monstor_forward.1} parent=0 // pred_fallthru
    _
  // Predicated region
  $region30: #{monstor_forward.1} parent=0 // pred_check
    _
  $region31: #{monstor_forward.1} parent=0 // pred_check_branch
    %37 = sbr.rel (0) target = $region33
  $region32: #{monstor_forward.1} parent=0 // pred_region
    _
  $region33: #{monstor_forward.1} parent=0 // pred_fallthru
    _
  // Predicated region
  $region34: #{monstor_forward.1} parent=0 // pred_check
    _
  $region35: #{monstor_forward.1} parent=0 // pred_check_branch
    %39 = sbr.rel (0) target = $region37
  $region36: #{monstor_forward.1} parent=0 // pred_region
    _
  $region37: #{monstor_forward.1} parent=0 // pred_fallthru
    _
  // Predicated region
  $region38: #{monstor_forward.1} parent=0 // pred_check
    _
  $region39: #{monstor_forward.1} parent=0 // pred_check_branch
    %41 = sbr.rel (0) target = $region41
  $region40: #{monstor_forward.1} parent=0 // pred_region
    _
  $region41: #{monstor_forward.1} parent=0 // pred_fallthru
    _
  // Predicated region
  $region42: #{monstor_forward.1} parent=0 // pred_check
    _
  $region43: #{monstor_forward.1} parent=0 // pred_check_branch
    %43 = sbr.rel (0) target = $region45
  $region44: #{monstor_forward.1} parent=0 // pred_region
    _
  $region45: #{monstor_forward.1} parent=0 // pred_fallthru
    _
  // Predicated region
  $region46: #{monstor_forward.1} parent=0 // pred_check
    _
  $region47: #{monstor_forward.1} parent=0 // pred_check_branch
    %45 = sbr.rel (0) target = $region49
  $region48: #{monstor_forward.1} parent=0 // pred_region
    _
  $region49: #{monstor_forward.1} parent=0 // pred_fallthru
    _
  // Predicated region
  $region50: #{monstor_forward.1} parent=0 // pred_check
    _
  $region51: #{monstor_forward.1} parent=0 // pred_check_branch
    %47 = sbr.rel (0) target = $region53
  $region52: #{monstor_forward.1} parent=0 // pred_region
    _
  $region53: #{monstor_forward.1} parent=0 // pred_fallthru
    _
  // Predicated region
  $region54: #{monstor_forward.1} parent=0 // pred_check
    _
  $region55: #{monstor_forward.1} parent=0 // pred_check_branch
    %49 = sbr.rel (0) target = $region57
  $region56: #{monstor_forward.1} parent=0 // pred_region
    _
  $region57: #{monstor_forward.1} parent=0 // pred_fallthru
    _
  // Predicated region
  $region58: #{monstor_forward.1} parent=0 // pred_check
    _
  $region59: #{monstor_forward.1} parent=0 // pred_check_branch
    %51 = sbr.rel (0) target = $region61
  $region60: #{monstor_forward.1} parent=0 // pred_region
    _
  $region61: #{monstor_forward.1} parent=0 // pred_fallthru
    _
  %v52 = vld [vmem:[%s1] sm:$0xff]
  %v53 = vld [vmem:[%s1 + $0x8] sm:$0xff]
  %v54 = vld [vmem:[%s2] sm:$0xff]
  %v55 = vld [vmem:[%s2 + $0x8] sm:$0xff]
  %vm56 = vcmask 130048
  %v57 = vsel %vm56, %v54, 0.0
  %58 = vadd.xlane.f32.xlu0 %v57
  %v59 = vpop.xlane.xlu0 %58
  %v60 = vsel %vm56, %v55, 0.0
  %61 = vadd.xlane.f32.xlu0 %v60
  %v62 = vpop.xlane.xlu0 %61
  %vm63 = vcmp.gt.f32.partialorder %v59, 0.0
  %vm64 = vcmp.gt.f32.partialorder %v62, 0.0
  %v65 = vmax.f32 %v59, 1.0
  %v66 = vmax.f32 %v62, 1.0
  %v67 = vrcp.pop %v65
  %v68 = vmul.f32 1.0, %v67
  %v69 = vrcp.pop %v66
  %v70 = vmul.f32 1.0, %v69
  %v71 = vsel %vm63, %v68, 0.0
  %v72 = vsel %vm64, %v70, 0.0
  %vm73 = vcmp.gt.f32.partialorder %v54, 0.0
  %vm74 = vcmp.gt.f32.partialorder %v55, 0.0
  %v75 = vld [vmem:[%s0] sm:$0xff]
  %v76 = vld [vmem:[%s0 + $0x8] sm:$0xff]
  %v77 = vld [vmem:[%s3] sm:$0xf]
  %v78 = vld [vmem:[%s4] sm:$0x1]
  %v79 = vld [vmem:[%s5] sm:$0xff]
  %v80 = vld [vmem:[%s5 + $0x8] sm:$0xff]
  %v81 = vld [vmem:[%s5 + $0x10] sm:$0xf]
  %v82 = vld [vmem:[%s6] sm:$0x1]
  %v84 = vlaneseq
  %v85 = vshrl.u32 %v84, 7
  %v86 = vsub.s32 0, %v85
  %v87 = vrot.slane %v78, %v86
  %vm89 = vcmask 31744
  %v91 = vsel %vm89, %v75, 0
  %v94 = vsel %vm89, %v76, 0
  %vm96 = vcmask 1043456
  %v98 = vsel %vm96, %v77, 0
  %100 = vmatprep.subr.mxu0 0.0
  %101 = vmatpush1.msra.mxu0 0.0
  %102 = vmatprep.subr.mxu0 0.0
  %103 = vmatpush1.msra.mxu0 0.0
  %104 = vmatprep.subr.mxu0 0.0
  %105 = vmatpush1.msra.mxu0 0.0
  %106 = vmatprep.subr.mxu0 0.0
  %107 = vmatpush1.msra.mxu0 0.0
  %108 = vmatprep.subr.mxu0 0.0
  %109 = vmatpush1.msra.mxu0 0.0
  %110 = vmatprep.subr.mxu0 0.0
  %111 = vmatpush1.msra.mxu0 0.0
  %112 = vmatprep.subr.mxu0 0.0
  %113 = vmatpush1.msra.mxu0 0.0
  %114 = vmatprep.subr.mxu0 0.0
  %115 = vmatpush1.msra.mxu0 0.0
  %116 = vmatprep.subr.mxu0 0.0
  %117 = vmatpush1.msra.mxu0 0.0
  %118 = vmatprep.subr.mxu0 0.0
  %119 = vmatpush1.msra.mxu0 0.0
  %120 = vmatprep.subr.mxu0 0.0
  %121 = vmatpush1.msra.mxu0 0.0
  %122 = vmatprep.subr.mxu0 0.0
  %123 = vmatpush1.msra.mxu0 0.0
  %124 = vmatprep.subr.mxu0 0.0
  %125 = vmatpush1.msra.mxu0 0.0
  %126 = vmatprep.subr.mxu0 0.0
  %127 = vmatpush1.msra.mxu0 0.0
  %128 = vmatprep.subr.mxu0 0.0
  %129 = vmatpush1.msra.mxu0 0.0
  %130 = vmatprep.subr.mxu0 0.0
  %131 = vmatpush1.msra.mxu0 %v98
  %132 = vmatprep.subr.mxu0 0.0
  %133 = vmatpush2.msra.mxu0 0.0
  %134 = vmatprep.subr.mxu0 0.0
  %135 = vmatpush2.msra.mxu0 0.0
  %136 = vmatprep.subr.mxu0 0.0
  %137 = vmatpush2.msra.mxu0 0.0
  %138 = vmatprep.subr.mxu0 0.0
  %139 = vmatpush2.msra.mxu0 0.0
  %140 = vmatprep.subr.mxu0 0.0
  %141 = vmatpush2.msra.mxu0 0.0
  %142 = vmatprep.subr.mxu0 0.0
  %143 = vmatpush2.msra.mxu0 0.0
  %144 = vmatprep.subr.mxu0 0.0
  %145 = vmatpush2.msra.mxu0 0.0
  %146 = vmatprep.subr.mxu0 0.0
  %147 = vmatpush2.msra.mxu0 0.0
  %148 = vmatprep.subr.mxu0 0.0
  %149 = vmatpush2.msra.mxu0 0.0
  %150 = vmatprep.subr.mxu0 0.0
  %151 = vmatpush2.msra.mxu0 0.0
  %152 = vmatprep.subr.mxu0 0.0
  %153 = vmatpush2.msra.mxu0 0.0
  %154 = vmatprep.subr.mxu0 0.0
  %155 = vmatpush2.msra.mxu0 0.0
  %156 = vmatprep.subr.mxu0 0.0
  %157 = vmatpush2.msra.mxu0 0.0
  %158 = vmatprep.subr.mxu0 0.0
  %159 = vmatpush2.msra.mxu0 0.0
  %160 = vmatprep.subr.mxu0 0.0
  %161 = vmatpush2.msra.mxu0 0.0
  %162 = vmatprep.subr.mxu0 0.0
  %163 = vmatpush2.msra.mxu0 0.0
  %164 = vmatprep.mubr.f32.mxu0 0.0
  %165 = vmatmul.mubr.f32.gmra.mxu0 %v91
  %v166 = vpop.f32.mrf.mxu0
  %v167 = vadd.f32 %v87, %v166
  %v168 = vpop.f32.mrf.mxu0
  %169 = vmatprep.mubr.f32.mxu0 0.0
  %170 = vmatmul.mubr.f32.gmra.mxu0 %v94
  %v171 = vpop.f32.mrf.mxu0
  %v172 = vadd.f32 %v87, %v171
  %v173 = vpop.f32.mrf.mxu0
  %174 = vdwg.mxu0
  %v175 = vmul.f32 %v167, %v167
  %v176 = vmul.f32 %v172, %v172
  %179 = vrot.lane.b32.xlu0 %v175, 4
  %v180 = vpop.permute.xlu0 %179
  %181 = vrot.lane.b32.xlu0 %v176, 4
  %v182 = vpop.permute.xlu0 %181
  %vm185 = vcmask 97280
  %v186 = vsel %vm185, %v167, %v180
  %v187 = vsel %vm185, %v172, %v182
  %v189 = vsel %vm56, %v52, 0
  %v192 = vsel %vm56, %v53, 0
  %194 = vmatprep.subr.mxu0 0.0
  %195 = vmatpush1.msra.mxu0 0.0
  %196 = vmatprep.subr.mxu0 0.0
  %197 = vmatpush1.msra.mxu0 0.0
  %198 = vmatprep.subr.mxu0 0.0
  %199 = vmatpush1.msra.mxu0 0.0
  %200 = vmatprep.subr.mxu0 0.0
  %201 = vmatpush1.msra.mxu0 0.0
  %202 = vmatprep.subr.mxu0 0.0
  %203 = vmatpush1.msra.mxu0 0.0
  %204 = vmatprep.subr.mxu0 0.0
  %205 = vmatpush1.msra.mxu0 0.0
  %206 = vmatprep.subr.mxu0 0.0
  %207 = vmatpush1.msra.mxu0 0.0
  %208 = vmatprep.subr.mxu0 0.0
  %209 = vmatpush1.msra.mxu0 0.0
  %210 = vmatprep.subr.mxu0 0.0
  %211 = vmatpush1.msra.mxu0 0.0
  %212 = vmatprep.subr.mxu0 0.0
  %213 = vmatpush1.msra.mxu0 0.0
  %214 = vmatprep.subr.mxu0 0.0
  %215 = vmatpush1.msra.mxu0 0.0
  %216 = vmatprep.subr.mxu0 0.0
  %217 = vmatpush1.msra.mxu0 0.0
  %218 = vmatprep.subr.mxu0 0.0
  %219 = vmatpush1.msra.mxu0 0.0
  %220 = vmatprep.subr.mxu0 0.0
  %221 = vmatpush1.msra.mxu0 0.0
  %222 = vmatprep.subr.mxu0 0.0
  %223 = vmatpush1.msra.mxu0 %v187
  %224 = vmatprep.subr.mxu0 0.0
  %225 = vmatpush1.msra.mxu0 %v186
  %226 = vmatprep.subr.mxu0 0.0
  %227 = vmatpush2.msra.mxu0 0.0
  %228 = vmatprep.subr.mxu0 0.0
  %229 = vmatpush2.msra.mxu0 0.0
  %230 = vmatprep.subr.mxu0 0.0
  %231 = vmatpush2.msra.mxu0 0.0
  %232 = vmatprep.subr.mxu0 0.0
  %233 = vmatpush2.msra.mxu0 0.0
  %234 = vmatprep.subr.mxu0 0.0
  %235 = vmatpush2.msra.mxu0 0.0
  %236 = vmatprep.subr.mxu0 0.0
  %237 = vmatpush2.msra.mxu0 0.0
  %238 = vmatprep.subr.mxu0 0.0
  %239 = vmatpush2.msra.mxu0 0.0
  %240 = vmatprep.subr.mxu0 0.0
  %241 = vmatpush2.msra.mxu0 0.0
  %242 = vmatprep.subr.mxu0 0.0
  %243 = vmatpush2.msra.mxu0 0.0
  %244 = vmatprep.subr.mxu0 0.0
  %245 = vmatpush2.msra.mxu0 0.0
  %246 = vmatprep.subr.mxu0 0.0
  %247 = vmatpush2.msra.mxu0 0.0
  %248 = vmatprep.subr.mxu0 0.0
  %249 = vmatpush2.msra.mxu0 0.0
  %250 = vmatprep.subr.mxu0 0.0
  %251 = vmatpush2.msra.mxu0 0.0
  %252 = vmatprep.subr.mxu0 0.0
  %253 = vmatpush2.msra.mxu0 0.0
  %254 = vmatprep.subr.mxu0 0.0
  %255 = vmatpush2.msra.mxu0 0.0
  %256 = vmatprep.subr.mxu0 0.0
  %257 = vmatpush2.msra.mxu0 0.0
  %258 = vmatprep.mubr.f32.mxu0 0.0
  %259 = vmatmul.mubr.f32.gmra.mxu0 %v189
  %v260 = vpop.f32.mrf.mxu0
  %v261 = vadd.f32 0.0, %v260
  %v262 = vpop.f32.mrf.mxu0
  %263 = vmatprep.mubr.f32.mxu0 0.0
  %264 = vmatmul.mubr.f32.gmra.mxu0 %v192
  %v265 = vpop.f32.mrf.mxu0
  %v266 = vadd.f32 0.0, %v265
  %v267 = vpop.f32.mrf.mxu0
  %268 = vdwg.mxu0
  %v269 = vlaneseq
  %v270 = vand.u32 %v269, 127
  %vm271 = vcmp.lt.s32.totalorder %v270, 4
  %v272 = vsel %vm271, 1.0, %v71
  %v273 = vsel %vm271, 1.0, %v72
  %v274 = vmul.f32 %v261, %v272
  %v275 = vmul.f32 %v266, %v273
  %v276 = vmul.f32 %v274, %v274
  %v277 = vmul.f32 %v275, %v275
  %280 = vrot.lane.b32.xlu0 %v276, 4
  %v281 = vpop.permute.xlu0 %280
  %282 = vrot.lane.b32.xlu0 %v277, 4
  %v283 = vpop.permute.xlu0 %282
  %v286 = vsub.f32 %v274, %v281
  %v287 = vsub.f32 %v275, %v283
  %290 = vrot.lane.b32.xlu0 %v167, 116
  %v291 = vpop.permute.xlu0 %290
  %292 = vrot.lane.b32.xlu0 %v172, 116
  %v293 = vpop.permute.xlu0 %292
  %296 = vxpose.xlu0.b32.start [1/16] %v291, 128
  %297 = vxpose.xlu0.b32.cont [2/16] %v293, 128
  %298 = vxpose.xlu0.b32.cont [3/16] 0.0, 128
  %299 = vxpose.xlu0.b32.cont [4/16] 0.0, 128
  %300 = vxpose.xlu0.b32.cont [5/16] 0.0, 128
  %301 = vxpose.xlu0.b32.cont [6/16] 0.0, 128
  %302 = vxpose.xlu0.b32.cont [7/16] 0.0, 128
  %303 = vxpose.xlu0.b32.cont [8/16] 0.0, 128
  %304 = vxpose.xlu0.b32.cont [9/16] 0.0, 128
  %305 = vxpose.xlu0.b32.cont [10/16] 0.0, 128
  %306 = vxpose.xlu0.b32.cont [11/16] 0.0, 128
  %307 = vxpose.xlu0.b32.cont [12/16] 0.0, 128
  %308 = vxpose.xlu0.b32.cont [13/16] 0.0, 128
  %309 = vxpose.xlu0.b32.cont [14/16] 0.0, 128
  %310 = vxpose.xlu0.b32.cont [15/16] 0.0, 128
  %311 = vxpose.xlu0.b32.end [16/16] 0.0, 128
  %v312 = vpop.trf.xlu0
  %v313 = vpop.trf.xlu0
  %v314 = vpop.trf.xlu0
  %v315 = vpop.trf.xlu0
  %v316 = vpop.trf.xlu0
  %v317 = vpop.trf.xlu0
  %v318 = vpop.trf.xlu0
  %v319 = vpop.trf.xlu0
  %v320 = vpop.trf.xlu0
  %v321 = vpop.trf.xlu0
  %v322 = vpop.trf.xlu0
  %v323 = vpop.trf.xlu0
  %v324 = vpop.trf.xlu0
  %v325 = vpop.trf.xlu0
  %v326 = vpop.trf.xlu0
  %v327 = vpop.trf.xlu0
  %v328 = vlaneseq
  %v329 = vshrl.u32 %v328, 7
  %v330 = vsub.s32 0, %v329
  %v331 = vrot.slane %v312, %v330
  %v332 = vmul.f32 %v52, %v331
  %v333 = vmul.f32 %v53, %v331
  %v334 = vsel %vm73, %v332, -inf
  %v335 = vsel %vm74, %v333, -inf
  %v336 = vsel %vm56, %v334, -inf
  %337 = vmax.xlane.f32.xlu0 %v336
  %v338 = vpop.xlane.xlu0 %337
  %v339 = vsel %vm56, %v335, -inf
  %340 = vmax.xlane.f32.xlu0 %v339
  %v341 = vpop.xlane.xlu0 %340
  %v342 = vlaneseq
  %v343 = vshrl.u32 %v342, 7
  %v344 = vsub.s32 1, %v343
  %v345 = vrot.slane %v312, %v344
  %v346 = vmul.f32 %v52, %v345
  %v347 = vmul.f32 %v53, %v345
  %v348 = vsel %vm73, %v346, -inf
  %v349 = vsel %vm74, %v347, -inf
  %v350 = vsel %vm56, %v348, -inf
  %351 = vmax.xlane.f32.xlu0 %v350
  %v352 = vpop.xlane.xlu0 %351
  %v353 = vsel %vm56, %v349, -inf
  %354 = vmax.xlane.f32.xlu0 %v353
  %v355 = vpop.xlane.xlu0 %354
  %v356 = vlaneseq
  %v357 = vshrl.u32 %v356, 7
  %v358 = vsub.s32 2, %v357
  %v359 = vrot.slane %v312, %v358
  %v360 = vmul.f32 %v52, %v359
  %v361 = vmul.f32 %v53, %v359
  %v362 = vsel %vm73, %v360, -inf
  %v363 = vsel %vm74, %v361, -inf
  %v364 = vsel %vm56, %v362, -inf
  %365 = vmax.xlane.f32.xlu0 %v364
  %v366 = vpop.xlane.xlu0 %365
  %v367 = vsel %vm56, %v363, -inf
  %368 = vmax.xlane.f32.xlu0 %v367
  %v369 = vpop.xlane.xlu0 %368
  %v370 = vlaneseq
  %v371 = vshrl.u32 %v370, 7
  %v372 = vsub.s32 3, %v371
  %v373 = vrot.slane %v312, %v372
  %v374 = vmul.f32 %v52, %v373
  %v375 = vmul.f32 %v53, %v373
  %v376 = vsel %vm73, %v374, -inf
  %v377 = vsel %vm74, %v375, -inf
  %v378 = vsel %vm56, %v376, -inf
  %379 = vmax.xlane.f32.xlu0 %v378
  %v380 = vpop.xlane.xlu0 %379
  %v381 = vsel %vm56, %v377, -inf
  %382 = vmax.xlane.f32.xlu0 %v381
  %v383 = vpop.xlane.xlu0 %382
  %vm384 = vcmask 7168
  %v385 = vsel %vm384, %v338, %v352
  %v386 = vsel %vm384, %v341, %v355
  %vm387 = vcmask 15360
  %v388 = vsel %vm387, %v385, %v366
  %v389 = vsel %vm387, %v386, %v369
  %vm390 = vcmask 23552
  %v391 = vsel %vm390, %v388, %v380
  %v392 = vsel %vm390, %v389, %v383
  %v393 = vsel %vm63, 1, 0
  %v394 = vsel %vm64, 1, 0
  %vm395 = vcmp.eq.s32.totalorder %v393, 1
  %vm396 = vcmp.eq.s32.totalorder %v394, 1
  %v397 = vsel %vm395, %v274, 0.0
  %v398 = vsel %vm396, %v275, 0.0
  %v399 = vsel %vm395, %v391, 0.0
  %v400 = vsel %vm396, %v392, 0.0
  %v401 = vsel %vm395, %v286, 0.0
  %v402 = vsel %vm396, %v287, 0.0
  %405 = vrot.lane.b32.xlu0 %v397, 4
  %v406 = vpop.permute.xlu0 %405
  %407 = vrot.lane.b32.xlu0 %v398, 4
  %v408 = vpop.permute.xlu0 %407
  %413 = vrot.lane.b32.xlu0 %v399, 12
  %v414 = vpop.permute.xlu0 %413
  %415 = vrot.lane.b32.xlu0 %v400, 12
  %v416 = vpop.permute.xlu0 %415
  %421 = vrot.lane.b32.xlu0 %v401, 4
  %v422 = vpop.permute.xlu0 %421
  %423 = vrot.lane.b32.xlu0 %v402, 4
  %v424 = vpop.permute.xlu0 %423
  %v427 = vsel %vm89, %v75, %v406
  %v428 = vsel %vm89, %v76, %v408
  %vm429 = vcmask 64512
  %v430 = vsel %vm429, %v427, %v406
  %v431 = vsel %vm429, %v428, %v408
  %v432 = vsel %vm185, %v430, %v414
  %v433 = vsel %vm185, %v431, %v416
  %v434 = vsel %vm56, %v432, %v422
  %v435 = vsel %vm56, %v433, %v424
  %v437 = vlaneseq
  %v438 = vshrl.u32 %v437, 7
  %v439 = vsub.s32 0, %v438
  %v440 = vrot.slane %v82, %v439
  %vm442 = vcmask 162816
  %v444 = vsel %vm442, %v434, 0
  %v447 = vsel %vm442, %v435, 0
  %v450 = vsel %vm96, %v81, 0
  %452 = vmatprep.subr.mxu0 0.0
  %453 = vmatpush1.msra.mxu0 0.0
  %454 = vmatprep.subr.mxu0 0.0
  %455 = vmatpush1.msra.mxu0 0.0
  %456 = vmatprep.subr.mxu0 0.0
  %457 = vmatpush1.msra.mxu0 0.0
  %458 = vmatprep.subr.mxu0 0.0
  %459 = vmatpush1.msra.mxu0 0.0
  %460 = vmatprep.subr.mxu0 0.0
  %461 = vmatpush1.msra.mxu0 0.0
  %462 = vmatprep.subr.mxu0 0.0
  %463 = vmatpush1.msra.mxu0 0.0
  %464 = vmatprep.subr.mxu0 0.0
  %465 = vmatpush1.msra.mxu0 0.0
  %466 = vmatprep.subr.mxu0 0.0
  %467 = vmatpush1.msra.mxu0 0.0
  %468 = vmatprep.subr.mxu0 0.0
  %469 = vmatpush1.msra.mxu0 0.0
  %470 = vmatprep.subr.mxu0 0.0
  %471 = vmatpush1.msra.mxu0 0.0
  %472 = vmatprep.subr.mxu0 0.0
  %473 = vmatpush1.msra.mxu0 0.0
  %474 = vmatprep.subr.mxu0 0.0
  %475 = vmatpush1.msra.mxu0 0.0
  %476 = vmatprep.subr.mxu0 0.0
  %477 = vmatpush1.msra.mxu0 0.0
  %478 = vmatprep.subr.mxu0 0.0
  %479 = vmatpush1.msra.mxu0 %v450
  %480 = vmatprep.subr.mxu0 0.0
  %481 = vmatpush1.msra.mxu0 %v80
  %482 = vmatprep.subr.mxu0 0.0
  %483 = vmatpush1.msra.mxu0 %v79
  %484 = vmatprep.subr.mxu0 0.0
  %485 = vmatpush2.msra.mxu0 0.0
  %486 = vmatprep.subr.mxu0 0.0
  %487 = vmatpush2.msra.mxu0 0.0
  %488 = vmatprep.subr.mxu0 0.0
  %489 = vmatpush2.msra.mxu0 0.0
  %490 = vmatprep.subr.mxu0 0.0
  %491 = vmatpush2.msra.mxu0 0.0
  %492 = vmatprep.subr.mxu0 0.0
  %493 = vmatpush2.msra.mxu0 0.0
  %494 = vmatprep.subr.mxu0 0.0
  %495 = vmatpush2.msra.mxu0 0.0
  %496 = vmatprep.subr.mxu0 0.0
  %497 = vmatpush2.msra.mxu0 0.0
  %498 = vmatprep.subr.mxu0 0.0
  %499 = vmatpush2.msra.mxu0 0.0
  %500 = vmatprep.subr.mxu0 0.0
  %501 = vmatpush2.msra.mxu0 0.0
  %502 = vmatprep.subr.mxu0 0.0
  %503 = vmatpush2.msra.mxu0 0.0
  %504 = vmatprep.subr.mxu0 0.0
  %505 = vmatpush2.msra.mxu0 0.0
  %506 = vmatprep.subr.mxu0 0.0
  %507 = vmatpush2.msra.mxu0 0.0
  %508 = vmatprep.subr.mxu0 0.0
  %509 = vmatpush2.msra.mxu0 0.0
  %510 = vmatprep.subr.mxu0 0.0
  %511 = vmatpush2.msra.mxu0 0.0
  %512 = vmatprep.subr.mxu0 0.0
  %513 = vmatpush2.msra.mxu0 0.0
  %514 = vmatprep.subr.mxu0 0.0
  %515 = vmatpush2.msra.mxu0 0.0
  %516 = vmatprep.mubr.f32.mxu0 0.0
  %517 = vmatmul.mubr.f32.gmra.mxu0 %v444
  %v518 = vpop.f32.mrf.mxu0
  %v519 = vadd.f32 %v440, %v518
  %v520 = vpop.f32.mrf.mxu0
  %521 = vmatprep.mubr.f32.mxu0 0.0
  %522 = vmatmul.mubr.f32.gmra.mxu0 %v447
  %v523 = vpop.f32.mrf.mxu0
  %v524 = vadd.f32 %v440, %v523
  %v525 = vpop.f32.mrf.mxu0
  %526 = vdwg.mxu0
  %v527 = vmax.f32 %v519, 0.0
  %v528 = vmax.f32 %v524, 0.0
  %v529 = vld [vmem:[%s7] sm:$0xff]
  %v530 = vld [vmem:[%s8] sm:$0x1]
  %v531 = vld [vmem:[%s9] sm:$0xff]
  %v532 = vld [vmem:[%s9 + $0x8] sm:$0xff]
  %v533 = vld [vmem:[%s9 + $0x10] sm:$0xff]
  %v534 = vld [vmem:[%s9 + $0x18] sm:$0xff]
  %v535 = vld [vmem:[%s9 + $0x20] sm:$0xff]
  %v536 = vld [vmem:[%s10] sm:$0x1]
  %v538 = vlaneseq
  %v539 = vshrl.u32 %v538, 7
  %v540 = vsub.s32 0, %v539
  %v541 = vrot.slane %v530, %v540
  %v544 = vsel %vm429, %v527, 0
  %v547 = vsel %vm429, %v528, 0
  %549 = vmatprep.subr.mxu0 0.0
  %550 = vmatpush1.msra.mxu0 0.0
  %551 = vmatprep.subr.mxu0 0.0
  %552 = vmatpush1.msra.mxu0 0.0
  %553 = vmatprep.subr.mxu0 0.0
  %554 = vmatpush1.msra.mxu0 0.0
  %555 = vmatprep.subr.mxu0 0.0
  %556 = vmatpush1.msra.mxu0 0.0
  %557 = vmatprep.subr.mxu0 0.0
  %558 = vmatpush1.msra.mxu0 0.0
  %559 = vmatprep.subr.mxu0 0.0
  %560 = vmatpush1.msra.mxu0 0.0
  %561 = vmatprep.subr.mxu0 0.0
  %562 = vmatpush1.msra.mxu0 0.0
  %563 = vmatprep.subr.mxu0 0.0
  %564 = vmatpush1.msra.mxu0 0.0
  %565 = vmatprep.subr.mxu0 0.0
  %566 = vmatpush1.msra.mxu0 0.0
  %567 = vmatprep.subr.mxu0 0.0
  %568 = vmatpush1.msra.mxu0 0.0
  %569 = vmatprep.subr.mxu0 0.0
  %570 = vmatpush1.msra.mxu0 0.0
  %571 = vmatprep.subr.mxu0 0.0
  %572 = vmatpush1.msra.mxu0 0.0
  %573 = vmatprep.subr.mxu0 0.0
  %574 = vmatpush1.msra.mxu0 0.0
  %575 = vmatprep.subr.mxu0 0.0
  %576 = vmatpush1.msra.mxu0 0.0
  %577 = vmatprep.subr.mxu0 0.0
  %578 = vmatpush1.msra.mxu0 0.0
  %579 = vmatprep.subr.mxu0 0.0
  %580 = vmatpush1.msra.mxu0 %v529
  %581 = vmatprep.subr.mxu0 0.0
  %582 = vmatpush2.msra.mxu0 0.0
  %583 = vmatprep.subr.mxu0 0.0
  %584 = vmatpush2.msra.mxu0 0.0
  %585 = vmatprep.subr.mxu0 0.0
  %586 = vmatpush2.msra.mxu0 0.0
  %587 = vmatprep.subr.mxu0 0.0
  %588 = vmatpush2.msra.mxu0 0.0
  %589 = vmatprep.subr.mxu0 0.0
  %590 = vmatpush2.msra.mxu0 0.0
  %591 = vmatprep.subr.mxu0 0.0
  %592 = vmatpush2.msra.mxu0 0.0
  %593 = vmatprep.subr.mxu0 0.0
  %594 = vmatpush2.msra.mxu0 0.0
  %595 = vmatprep.subr.mxu0 0.0
  %596 = vmatpush2.msra.mxu0 0.0
  %597 = vmatprep.subr.mxu0 0.0
  %598 = vmatpush2.msra.mxu0 0.0
  %599 = vmatprep.subr.mxu0 0.0
  %600 = vmatpush2.msra.mxu0 0.0
  %601 = vmatprep.subr.mxu0 0.0
  %602 = vmatpush2.msra.mxu0 0.0
  %603 = vmatprep.subr.mxu0 0.0
  %604 = vmatpush2.msra.mxu0 0.0
  %605 = vmatprep.subr.mxu0 0.0
  %606 = vmatpush2.msra.mxu0 0.0
  %607 = vmatprep.subr.mxu0 0.0
  %608 = vmatpush2.msra.mxu0 0.0
  %609 = vmatprep.subr.mxu0 0.0
  %610 = vmatpush2.msra.mxu0 0.0
  %611 = vmatprep.subr.mxu0 0.0
  %612 = vmatpush2.msra.mxu0 0.0
  %613 = vmatprep.mubr.f32.mxu0 0.0
  %614 = vmatmul.mubr.f32.gmra.mxu0 %v544
  %v615 = vpop.f32.mrf.mxu0
  %v616 = vadd.f32 %v541, %v615
  %v617 = vpop.f32.mrf.mxu0
  %618 = vmatprep.mubr.f32.mxu0 0.0
  %619 = vmatmul.mubr.f32.gmra.mxu0 %v547
  %v620 = vpop.f32.mrf.mxu0
  %v621 = vadd.f32 %v541, %v620
  %v622 = vpop.f32.mrf.mxu0
  %623 = vdwg.mxu0
  %v624 = vmul.f32 %v616, %v616
  %v625 = vmul.f32 %v621, %v621
  %628 = vrot.lane.b32.xlu0 %v624, 8
  %v629 = vpop.permute.xlu0 %628
  %630 = vrot.lane.b32.xlu0 %v625, 8
  %v631 = vpop.permute.xlu0 %630
  %vm634 = vcmask 195584
  %v635 = vsel %vm634, %v616, %v629
  %v636 = vsel %vm634, %v621, %v631
  %637 = vmatprep.subr.mxu0 0.0
  %638 = vmatpush1.msra.mxu0 0.0
  %639 = vmatprep.subr.mxu0 0.0
  %640 = vmatpush1.msra.mxu0 0.0
  %641 = vmatprep.subr.mxu0 0.0
  %642 = vmatpush1.msra.mxu0 0.0
  %643 = vmatprep.subr.mxu0 0.0
  %644 = vmatpush1.msra.mxu0 0.0
  %645 = vmatprep.subr.mxu0 0.0
  %646 = vmatpush1.msra.mxu0 0.0
  %647 = vmatprep.subr.mxu0 0.0
  %648 = vmatpush1.msra.mxu0 0.0
  %649 = vmatprep.subr.mxu0 0.0
  %650 = vmatpush1.msra.mxu0 0.0
  %651 = vmatprep.subr.mxu0 0.0
  %652 = vmatpush1.msra.mxu0 0.0
  %653 = vmatprep.subr.mxu0 0.0
  %654 = vmatpush1.msra.mxu0 0.0
  %655 = vmatprep.subr.mxu0 0.0
  %656 = vmatpush1.msra.mxu0 0.0
  %657 = vmatprep.subr.mxu0 0.0
  %658 = vmatpush1.msra.mxu0 0.0
  %659 = vmatprep.subr.mxu0 0.0
  %660 = vmatpush1.msra.mxu0 0.0
  %661 = vmatprep.subr.mxu0 0.0
  %662 = vmatpush1.msra.mxu0 0.0
  %663 = vmatprep.subr.mxu0 0.0
  %664 = vmatpush1.msra.mxu0 0.0
  %665 = vmatprep.subr.mxu0 0.0
  %666 = vmatpush1.msra.mxu0 %v636
  %667 = vmatprep.subr.mxu0 0.0
  %668 = vmatpush1.msra.mxu0 %v635
  %669 = vmatprep.subr.mxu0 0.0
  %670 = vmatpush2.msra.mxu0 0.0
  %671 = vmatprep.subr.mxu0 0.0
  %672 = vmatpush2.msra.mxu0 0.0
  %673 = vmatprep.subr.mxu0 0.0
  %674 = vmatpush2.msra.mxu0 0.0
  %675 = vmatprep.subr.mxu0 0.0
  %676 = vmatpush2.msra.mxu0 0.0
  %677 = vmatprep.subr.mxu0 0.0
  %678 = vmatpush2.msra.mxu0 0.0
  %679 = vmatprep.subr.mxu0 0.0
  %680 = vmatpush2.msra.mxu0 0.0
  %681 = vmatprep.subr.mxu0 0.0
  %682 = vmatpush2.msra.mxu0 0.0
  %683 = vmatprep.subr.mxu0 0.0
  %684 = vmatpush2.msra.mxu0 0.0
  %685 = vmatprep.subr.mxu0 0.0
  %686 = vmatpush2.msra.mxu0 0.0
  %687 = vmatprep.subr.mxu0 0.0
  %688 = vmatpush2.msra.mxu0 0.0
  %689 = vmatprep.subr.mxu0 0.0
  %690 = vmatpush2.msra.mxu0 0.0
  %691 = vmatprep.subr.mxu0 0.0
  %692 = vmatpush2.msra.mxu0 0.0
  %693 = vmatprep.subr.mxu0 0.0
  %694 = vmatpush2.msra.mxu0 0.0
  %695 = vmatprep.subr.mxu0 0.0
  %696 = vmatpush2.msra.mxu0 0.0
  %697 = vmatprep.subr.mxu0 0.0
  %698 = vmatpush2.msra.mxu0 0.0
  %699 = vmatprep.subr.mxu0 0.0
  %700 = vmatpush2.msra.mxu0 0.0
  %701 = vmatprep.mubr.f32.mxu0 0.0
  %702 = vmatmul.mubr.f32.gmra.mxu0 %v189
  %v703 = vpop.f32.mrf.mxu0
  %v704 = vadd.f32 0.0, %v703
  %v705 = vpop.f32.mrf.mxu0
  %706 = vmatprep.mubr.f32.mxu0 0.0
  %707 = vmatmul.mubr.f32.gmra.mxu0 %v192
  %v708 = vpop.f32.mrf.mxu0
  %v709 = vadd.f32 0.0, %v708
  %v710 = vpop.f32.mrf.mxu0
  %711 = vdwg.mxu0
  %vm712 = vcmp.lt.s32.totalorder %v270, 8
  %v713 = vsel %vm712, 1.0, %v71
  %v714 = vsel %vm712, 1.0, %v72
  %v715 = vmul.f32 %v704, %v713
  %v716 = vmul.f32 %v709, %v714
  %v717 = vmul.f32 %v715, %v715
  %v718 = vmul.f32 %v716, %v716
  %721 = vrot.lane.b32.xlu0 %v717, 8
  %v722 = vpop.permute.xlu0 %721
  %723 = vrot.lane.b32.xlu0 %v718, 8
  %v724 = vpop.permute.xlu0 %723
  %v727 = vsub.f32 %v715, %v722
  %v728 = vsub.f32 %v716, %v724
  %731 = vrot.lane.b32.xlu0 %v616, 104
  %v732 = vpop.permute.xlu0 %731
  %733 = vrot.lane.b32.xlu0 %v621, 104
  %v734 = vpop.permute.xlu0 %733
  %737 = vxpose.xlu0.b32.start [1/16] %v732, 128
  %738 = vxpose.xlu0.b32.cont [2/16] %v734, 128
  %739 = vxpose.xlu0.b32.cont [3/16] 0.0, 128
  %740 = vxpose.xlu0.b32.cont [4/16] 0.0, 128
  %741 = vxpose.xlu0.b32.cont [5/16] 0.0, 128
  %742 = vxpose.xlu0.b32.cont [6/16] 0.0, 128
  %743 = vxpose.xlu0.b32.cont [7/16] 0.0, 128
  %744 = vxpose.xlu0.b32.cont [8/16] 0.0, 128
  %745 = vxpose.xlu0.b32.cont [9/16] 0.0, 128
  %746 = vxpose.xlu0.b32.cont [10/16] 0.0, 128
  %747 = vxpose.xlu0.b32.cont [11/16] 0.0, 128
  %748 = vxpose.xlu0.b32.cont [12/16] 0.0, 128
  %749 = vxpose.xlu0.b32.cont [13/16] 0.0, 128
  %750 = vxpose.xlu0.b32.cont [14/16] 0.0, 128
  %751 = vxpose.xlu0.b32.cont [15/16] 0.0, 128
  %752 = vxpose.xlu0.b32.end [16/16] 0.0, 128
  %v753 = vpop.trf.xlu0
  %v754 = vpop.trf.xlu0
  %v755 = vpop.trf.xlu0
  %v756 = vpop.trf.xlu0
  %v757 = vpop.trf.xlu0
  %v758 = vpop.trf.xlu0
  %v759 = vpop.trf.xlu0
  %v760 = vpop.trf.xlu0
  %v761 = vpop.trf.xlu0
  %v762 = vpop.trf.xlu0
  %v763 = vpop.trf.xlu0
  %v764 = vpop.trf.xlu0
  %v765 = vpop.trf.xlu0
  %v766 = vpop.trf.xlu0
  %v767 = vpop.trf.xlu0
  %v768 = vpop.trf.xlu0
  %v769 = vlaneseq
  %v770 = vshrl.u32 %v769, 7
  %v771 = vsub.s32 0, %v770
  %v772 = vrot.slane %v753, %v771
  %v773 = vmul.f32 %v52, %v772
  %v774 = vmul.f32 %v53, %v772
  %v775 = vsel %vm73, %v773, -inf
  %v776 = vsel %vm74, %v774, -inf
  %v777 = vsel %vm56, %v775, -inf
  %778 = vmax.xlane.f32.xlu0 %v777
  %v779 = vpop.xlane.xlu0 %778
  %v780 = vsel %vm56, %v776, -inf
  %781 = vmax.xlane.f32.xlu0 %v780
  %v782 = vpop.xlane.xlu0 %781
  %v783 = vlaneseq
  %v784 = vshrl.u32 %v783, 7
  %v785 = vsub.s32 1, %v784
  %v786 = vrot.slane %v753, %v785
  %v787 = vmul.f32 %v52, %v786
  %v788 = vmul.f32 %v53, %v786
  %v789 = vsel %vm73, %v787, -inf
  %v790 = vsel %vm74, %v788, -inf
  %v791 = vsel %vm56, %v789, -inf
  %792 = vmax.xlane.f32.xlu0 %v791
  %v793 = vpop.xlane.xlu0 %792
  %v794 = vsel %vm56, %v790, -inf
  %795 = vmax.xlane.f32.xlu0 %v794
  %v796 = vpop.xlane.xlu0 %795
  %v797 = vlaneseq
  %v798 = vshrl.u32 %v797, 7
  %v799 = vsub.s32 2, %v798
  %v800 = vrot.slane %v753, %v799
  %v801 = vmul.f32 %v52, %v800
  %v802 = vmul.f32 %v53, %v800
  %v803 = vsel %vm73, %v801, -inf
  %v804 = vsel %vm74, %v802, -inf
  %v805 = vsel %vm56, %v803, -inf
  %806 = vmax.xlane.f32.xlu0 %v805
  %v807 = vpop.xlane.xlu0 %806
  %v808 = vsel %vm56, %v804, -inf
  %809 = vmax.xlane.f32.xlu0 %v808
  %v810 = vpop.xlane.xlu0 %809
  %v811 = vlaneseq
  %v812 = vshrl.u32 %v811, 7
  %v813 = vsub.s32 3, %v812
  %v814 = vrot.slane %v753, %v813
  %v815 = vmul.f32 %v52, %v814
  %v816 = vmul.f32 %v53, %v814
  %v817 = vsel %vm73, %v815, -inf
  %v818 = vsel %vm74, %v816, -inf
  %v819 = vsel %vm56, %v817, -inf
  %820 = vmax.xlane.f32.xlu0 %v819
  %v821 = vpop.xlane.xlu0 %820
  %v822 = vsel %vm56, %v818, -inf
  %823 = vmax.xlane.f32.xlu0 %v822
  %v824 = vpop.xlane.xlu0 %823
  %v825 = vlaneseq
  %v826 = vshrl.u32 %v825, 7
  %v827 = vsub.s32 4, %v826
  %v828 = vrot.slane %v753, %v827
  %v829 = vmul.f32 %v52, %v828
  %v830 = vmul.f32 %v53, %v828
  %v831 = vsel %vm73, %v829, -inf
  %v832 = vsel %vm74, %v830, -inf
  %v833 = vsel %vm56, %v831, -inf
  %834 = vmax.xlane.f32.xlu0 %v833
  %v835 = vpop.xlane.xlu0 %834
  %v836 = vsel %vm56, %v832, -inf
  %837 = vmax.xlane.f32.xlu0 %v836
  %v838 = vpop.xlane.xlu0 %837
  %v839 = vlaneseq
  %v840 = vshrl.u32 %v839, 7
  %v841 = vsub.s32 5, %v840
  %v842 = vrot.slane %v753, %v841
  %v843 = vmul.f32 %v52, %v842
  %v844 = vmul.f32 %v53, %v842
  %v845 = vsel %vm73, %v843, -inf
  %v846 = vsel %vm74, %v844, -inf
  %v847 = vsel %vm56, %v845, -inf
  %848 = vmax.xlane.f32.xlu0 %v847
  %v849 = vpop.xlane.xlu0 %848
  %v850 = vsel %vm56, %v846, -inf
  %851 = vmax.xlane.f32.xlu0 %v850
  %v852 = vpop.xlane.xlu0 %851
  %v853 = vlaneseq
  %v854 = vshrl.u32 %v853, 7
  %v855 = vsub.s32 6, %v854
  %v856 = vrot.slane %v753, %v855
  %v857 = vmul.f32 %v52, %v856
  %v858 = vmul.f32 %v53, %v856
  %v859 = vsel %vm73, %v857, -inf
  %v860 = vsel %vm74, %v858, -inf
  %v861 = vsel %vm56, %v859, -inf
  %862 = vmax.xlane.f32.xlu0 %v861
  %v863 = vpop.xlane.xlu0 %862
  %v864 = vsel %vm56, %v860, -inf
  %865 = vmax.xlane.f32.xlu0 %v864
  %v866 = vpop.xlane.xlu0 %865
  %v867 = vlaneseq
  %v868 = vshrl.u32 %v867, 7
  %v869 = vsub.s32 7, %v868
  %v870 = vrot.slane %v753, %v869
  %v871 = vmul.f32 %v52, %v870
  %v872 = vmul.f32 %v53, %v870
  %v873 = vsel %vm73, %v871, -inf
  %v874 = vsel %vm74, %v872, -inf
  %v875 = vsel %vm56, %v873, -inf
  %876 = vmax.xlane.f32.xlu0 %v875
  %v877 = vpop.xlane.xlu0 %876
  %v878 = vsel %vm56, %v874, -inf
  %879 = vmax.xlane.f32.xlu0 %v878
  %v880 = vpop.xlane.xlu0 %879
  %v881 = vsel %vm384, %v779, %v793
  %v882 = vsel %vm384, %v782, %v796
  %v883 = vsel %vm387, %v881, %v807
  %v884 = vsel %vm387, %v882, %v810
  %v885 = vsel %vm390, %v883, %v821
  %v886 = vsel %vm390, %v884, %v824
  %v887 = vsel %vm89, %v885, %v835
  %v888 = vsel %vm89, %v886, %v838
  %vm889 = vcmask 39936
  %v890 = vsel %vm889, %v887, %v849
  %v891 = vsel %vm889, %v888, %v852
  %vm892 = vcmask 48128
  %v893 = vsel %vm892, %v890, %v863
  %v894 = vsel %vm892, %v891, %v866
  %vm895 = vcmask 56320
  %v896 = vsel %vm895, %v893, %v877
  %v897 = vsel %vm895, %v894, %v880
  %v898 = vsel %vm395, %v715, 0.0
  %v899 = vsel %vm396, %v716, 0.0
  %v900 = vsel %vm395, %v896, 0.0
  %v901 = vsel %vm396, %v897, 0.0
  %v902 = vsel %vm395, %v727, 0.0
  %v903 = vsel %vm396, %v728, 0.0
  %906 = vrot.lane.b32.xlu0 %v898, 8
  %v907 = vpop.permute.xlu0 %906
  %908 = vrot.lane.b32.xlu0 %v899, 8
  %v909 = vpop.permute.xlu0 %908
  %914 = vrot.lane.b32.xlu0 %v900, 24
  %v915 = vpop.permute.xlu0 %914
  %916 = vrot.lane.b32.xlu0 %v901, 24
  %v917 = vpop.permute.xlu0 %916
  %922 = vrot.lane.b32.xlu0 %v902, 8
  %v923 = vpop.permute.xlu0 %922
  %924 = vrot.lane.b32.xlu0 %v903, 8
  %v925 = vpop.permute.xlu0 %924
  %v928 = vsel %vm429, %v527, %v907
  %v929 = vsel %vm429, %v528, %v909
  %v930 = vsel %vm56, %v928, %v907
  %v931 = vsel %vm56, %v929, %v909
  %v932 = vsel %vm634, %v930, %v915
  %v933 = vsel %vm634, %v931, %v917
  %vm934 = vcmask 261120
  %v935 = vsel %vm934, %v932, %v923
  %v936 = vsel %vm934, %v933, %v925
  %v938 = vlaneseq
  %v939 = vshrl.u32 %v938, 7
  %v940 = vsub.s32 0, %v939
  %v941 = vrot.slane %v536, %v940
  %vm943 = vcmask 326656
  %v945 = vsel %vm943, %v935, 0
  %v948 = vsel %vm943, %v936, 0
  %950 = vmatprep.subr.mxu0 0.0
  %951 = vmatpush1.msra.mxu0 0.0
  %952 = vmatprep.subr.mxu0 0.0
  %953 = vmatpush1.msra.mxu0 0.0
  %954 = vmatprep.subr.mxu0 0.0
  %955 = vmatpush1.msra.mxu0 0.0
  %956 = vmatprep.subr.mxu0 0.0
  %957 = vmatpush1.msra.mxu0 0.0
  %958 = vmatprep.subr.mxu0 0.0
  %959 = vmatpush1.msra.mxu0 0.0
  %960 = vmatprep.subr.mxu0 0.0
  %961 = vmatpush1.msra.mxu0 0.0
  %962 = vmatprep.subr.mxu0 0.0
  %963 = vmatpush1.msra.mxu0 0.0
  %964 = vmatprep.subr.mxu0 0.0
  %965 = vmatpush1.msra.mxu0 0.0
  %966 = vmatprep.subr.mxu0 0.0
  %967 = vmatpush1.msra.mxu0 0.0
  %968 = vmatprep.subr.mxu0 0.0
  %969 = vmatpush1.msra.mxu0 0.0
  %970 = vmatprep.subr.mxu0 0.0
  %971 = vmatpush1.msra.mxu0 0.0
  %972 = vmatprep.subr.mxu0 0.0
  %973 = vmatpush1.msra.mxu0 %v535
  %974 = vmatprep.subr.mxu0 0.0
  %975 = vmatpush1.msra.mxu0 %v534
  %976 = vmatprep.subr.mxu0 0.0
  %977 = vmatpush1.msra.mxu0 %v533
  %978 = vmatprep.subr.mxu0 0.0
  %979 = vmatpush1.msra.mxu0 %v532
  %980 = vmatprep.subr.mxu0 0.0
  %981 = vmatpush1.msra.mxu0 %v531
  %982 = vmatprep.subr.mxu0 0.0
  %983 = vmatpush2.msra.mxu0 0.0
  %984 = vmatprep.subr.mxu0 0.0
  %985 = vmatpush2.msra.mxu0 0.0
  %986 = vmatprep.subr.mxu0 0.0
  %987 = vmatpush2.msra.mxu0 0.0
  %988 = vmatprep.subr.mxu0 0.0
  %989 = vmatpush2.msra.mxu0 0.0
  %990 = vmatprep.subr.mxu0 0.0
  %991 = vmatpush2.msra.mxu0 0.0
  %992 = vmatprep.subr.mxu0 0.0
  %993 = vmatpush2.msra.mxu0 0.0
  %994 = vmatprep.subr.mxu0 0.0
  %995 = vmatpush2.msra.mxu0 0.0
  %996 = vmatprep.subr.mxu0 0.0
  %997 = vmatpush2.msra.mxu0 0.0
  %998 = vmatprep.subr.mxu0 0.0
  %999 = vmatpush2.msra.mxu0 0.0
  %1000 = vmatprep.subr.mxu0 0.0
  %1001 = vmatpush2.msra.mxu0 0.0
  %1002 = vmatprep.subr.mxu0 0.0
  %1003 = vmatpush2.msra.mxu0 0.0
  %1004 = vmatprep.subr.mxu0 0.0
  %1005 = vmatpush2.msra.mxu0 0.0
  %1006 = vmatprep.subr.mxu0 0.0
  %1007 = vmatpush2.msra.mxu0 0.0
  %1008 = vmatprep.subr.mxu0 0.0
  %1009 = vmatpush2.msra.mxu0 0.0
  %1010 = vmatprep.subr.mxu0 0.0
  %1011 = vmatpush2.msra.mxu0 0.0
  %1012 = vmatprep.subr.mxu0 0.0
  %1013 = vmatpush2.msra.mxu0 0.0
  %1014 = vmatprep.mubr.f32.mxu0 0.0
  %1015 = vmatmul.mubr.f32.gmra.mxu0 %v945
  %v1016 = vpop.f32.mrf.mxu0
  %v1017 = vadd.f32 %v941, %v1016
  %v1018 = vpop.f32.mrf.mxu0
  %1019 = vmatprep.mubr.f32.mxu0 0.0
  %1020 = vmatmul.mubr.f32.gmra.mxu0 %v948
  %v1021 = vpop.f32.mrf.mxu0
  %v1022 = vadd.f32 %v941, %v1021
  %v1023 = vpop.f32.mrf.mxu0
  %1024 = vdwg.mxu0
  %v1025 = vmax.f32 %v1017, 0.0
  %v1026 = vmax.f32 %v1022, 0.0
  %v1027 = vld [vmem:[%s11] sm:$0xff]
  %v1028 = vld [vmem:[%s12] sm:$0x1]
  %v1029 = vld [vmem:[%s13] sm:$0xff]
  %v1030 = vld [vmem:[%s13 + $0x8] sm:$0xff]
  %v1031 = vld [vmem:[%s13 + $0x10] sm:$0xff]
  %v1032 = vld [vmem:[%s13 + $0x18] sm:$0xff]
  %v1033 = vld [vmem:[%s13 + $0x20] sm:$0xff]
  %v1034 = vld [vmem:[#allocation2] sm:$0x1]
  %v1036 = vlaneseq
  %v1037 = vshrl.u32 %v1036, 7
  %v1038 = vsub.s32 0, %v1037
  %v1039 = vrot.slane %v1028, %v1038
  %v1042 = vsel %vm429, %v1025, 0
  %v1045 = vsel %vm429, %v1026, 0
  %1047 = vmatprep.subr.mxu0 0.0
  %1048 = vmatpush1.msra.mxu0 0.0
  %1049 = vmatprep.subr.mxu0 0.0
  %1050 = vmatpush1.msra.mxu0 0.0
  %1051 = vmatprep.subr.mxu0 0.0
  %1052 = vmatpush1.msra.mxu0 0.0
  %1053 = vmatprep.subr.mxu0 0.0
  %1054 = vmatpush1.msra.mxu0 0.0
  %1055 = vmatprep.subr.mxu0 0.0
  %1056 = vmatpush1.msra.mxu0 0.0
  %1057 = vmatprep.subr.mxu0 0.0
  %1058 = vmatpush1.msra.mxu0 0.0
  %1059 = vmatprep.subr.mxu0 0.0
  %1060 = vmatpush1.msra.mxu0 0.0
  %1061 = vmatprep.subr.mxu0 0.0
  %1062 = vmatpush1.msra.mxu0 0.0
  %1063 = vmatprep.subr.mxu0 0.0
  %1064 = vmatpush1.msra.mxu0 0.0
  %1065 = vmatprep.subr.mxu0 0.0
  %1066 = vmatpush1.msra.mxu0 0.0
  %1067 = vmatprep.subr.mxu0 0.0
  %1068 = vmatpush1.msra.mxu0 0.0
  %1069 = vmatprep.subr.mxu0 0.0
  %1070 = vmatpush1.msra.mxu0 0.0
  %1071 = vmatprep.subr.mxu0 0.0
  %1072 = vmatpush1.msra.mxu0 0.0
  %1073 = vmatprep.subr.mxu0 0.0
  %1074 = vmatpush1.msra.mxu0 0.0
  %1075 = vmatprep.subr.mxu0 0.0
  %1076 = vmatpush1.msra.mxu0 0.0
  %1077 = vmatprep.subr.mxu0 0.0
  %1078 = vmatpush1.msra.mxu0 %v1027
  %1079 = vmatprep.subr.mxu0 0.0
  %1080 = vmatpush2.msra.mxu0 0.0
  %1081 = vmatprep.subr.mxu0 0.0
  %1082 = vmatpush2.msra.mxu0 0.0
  %1083 = vmatprep.subr.mxu0 0.0
  %1084 = vmatpush2.msra.mxu0 0.0
  %1085 = vmatprep.subr.mxu0 0.0
  %1086 = vmatpush2.msra.mxu0 0.0
  %1087 = vmatprep.subr.mxu0 0.0
  %1088 = vmatpush2.msra.mxu0 0.0
  %1089 = vmatprep.subr.mxu0 0.0
  %1090 = vmatpush2.msra.mxu0 0.0
  %1091 = vmatprep.subr.mxu0 0.0
  %1092 = vmatpush2.msra.mxu0 0.0
  %1093 = vmatprep.subr.mxu0 0.0
  %1094 = vmatpush2.msra.mxu0 0.0
  %1095 = vmatprep.subr.mxu0 0.0
  %1096 = vmatpush2.msra.mxu0 0.0
  %1097 = vmatprep.subr.mxu0 0.0
  %1098 = vmatpush2.msra.mxu0 0.0
  %1099 = vmatprep.subr.mxu0 0.0
  %1100 = vmatpush2.msra.mxu0 0.0
  %1101 = vmatprep.subr.mxu0 0.0
  %1102 = vmatpush2.msra.mxu0 0.0
  %1103 = vmatprep.subr.mxu0 0.0
  %1104 = vmatpush2.msra.mxu0 0.0
  %1105 = vmatprep.subr.mxu0 0.0
  %1106 = vmatpush2.msra.mxu0 0.0
  %1107 = vmatprep.subr.mxu0 0.0
  %1108 = vmatpush2.msra.mxu0 0.0
  %1109 = vmatprep.subr.mxu0 0.0
  %1110 = vmatpush2.msra.mxu0 0.0
  %1111 = vmatprep.mubr.f32.mxu0 0.0
  %1112 = vmatmul.mubr.f32.gmra.mxu0 %v1042
  %v1113 = vpop.f32.mrf.mxu0
  %v1114 = vadd.f32 %v1039, %v1113
  %v1115 = vpop.f32.mrf.mxu0
  %1116 = vmatprep.mubr.f32.mxu0 0.0
  %1117 = vmatmul.mubr.f32.gmra.mxu0 %v1045
  %v1118 = vpop.f32.mrf.mxu0
  %v1119 = vadd.f32 %v1039, %v1118
  %v1120 = vpop.f32.mrf.mxu0
  %1121 = vdwg.mxu0
  %v1122 = vmul.f32 %v1114, %v1114
  %v1123 = vmul.f32 %v1119, %v1119
  %1126 = vrot.lane.b32.xlu0 %v1122, 8
  %v1127 = vpop.permute.xlu0 %1126
  %1128 = vrot.lane.b32.xlu0 %v1123, 8
  %v1129 = vpop.permute.xlu0 %1128
  %v1132 = vsel %vm634, %v1114, %v1127
  %v1133 = vsel %vm634, %v1119, %v1129
  %1134 = vmatprep.subr.mxu0 0.0
  %1135 = vmatpush1.msra.mxu0 0.0
  %1136 = vmatprep.subr.mxu0 0.0
  %1137 = vmatpush1.msra.mxu0 0.0
  %1138 = vmatprep.subr.mxu0 0.0
  %1139 = vmatpush1.msra.mxu0 0.0
  %1140 = vmatprep.subr.mxu0 0.0
  %1141 = vmatpush1.msra.mxu0 0.0
  %1142 = vmatprep.subr.mxu0 0.0
  %1143 = vmatpush1.msra.mxu0 0.0
  %1144 = vmatprep.subr.mxu0 0.0
  %1145 = vmatpush1.msra.mxu0 0.0
  %1146 = vmatprep.subr.mxu0 0.0
  %1147 = vmatpush1.msra.mxu0 0.0
  %1148 = vmatprep.subr.mxu0 0.0
  %1149 = vmatpush1.msra.mxu0 0.0
  %1150 = vmatprep.subr.mxu0 0.0
  %1151 = vmatpush1.msra.mxu0 0.0
  %1152 = vmatprep.subr.mxu0 0.0
  %1153 = vmatpush1.msra.mxu0 0.0
  %1154 = vmatprep.subr.mxu0 0.0
  %1155 = vmatpush1.msra.mxu0 0.0
  %1156 = vmatprep.subr.mxu0 0.0
  %1157 = vmatpush1.msra.mxu0 0.0
  %1158 = vmatprep.subr.mxu0 0.0
  %1159 = vmatpush1.msra.mxu0 0.0
  %1160 = vmatprep.subr.mxu0 0.0
  %1161 = vmatpush1.msra.mxu0 0.0
  %1162 = vmatprep.subr.mxu0 0.0
  %1163 = vmatpush1.msra.mxu0 %v1133
  %1164 = vmatprep.subr.mxu0 0.0
  %1165 = vmatpush1.msra.mxu0 %v1132
  %1166 = vmatprep.subr.mxu0 0.0
  %1167 = vmatpush2.msra.mxu0 0.0
  %1168 = vmatprep.subr.mxu0 0.0
  %1169 = vmatpush2.msra.mxu0 0.0
  %1170 = vmatprep.subr.mxu0 0.0
  %1171 = vmatpush2.msra.mxu0 0.0
  %1172 = vmatprep.subr.mxu0 0.0
  %1173 = vmatpush2.msra.mxu0 0.0
  %1174 = vmatprep.subr.mxu0 0.0
  %1175 = vmatpush2.msra.mxu0 0.0
  %1176 = vmatprep.subr.mxu0 0.0
  %1177 = vmatpush2.msra.mxu0 0.0
  %1178 = vmatprep.subr.mxu0 0.0
  %1179 = vmatpush2.msra.mxu0 0.0
  %1180 = vmatprep.subr.mxu0 0.0
  %1181 = vmatpush2.msra.mxu0 0.0
  %1182 = vmatprep.subr.mxu0 0.0
  %1183 = vmatpush2.msra.mxu0 0.0
  %1184 = vmatprep.subr.mxu0 0.0
  %1185 = vmatpush2.msra.mxu0 0.0
  %1186 = vmatprep.subr.mxu0 0.0
  %1187 = vmatpush2.msra.mxu0 0.0
  %1188 = vmatprep.subr.mxu0 0.0
  %1189 = vmatpush2.msra.mxu0 0.0
  %1190 = vmatprep.subr.mxu0 0.0
  %1191 = vmatpush2.msra.mxu0 0.0
  %1192 = vmatprep.subr.mxu0 0.0
  %1193 = vmatpush2.msra.mxu0 0.0
  %1194 = vmatprep.subr.mxu0 0.0
  %1195 = vmatpush2.msra.mxu0 0.0
  %1196 = vmatprep.subr.mxu0 0.0
  %1197 = vmatpush2.msra.mxu0 0.0
  %1198 = vmatprep.mubr.f32.mxu0 0.0
  %1199 = vmatmul.mubr.f32.gmra.mxu0 %v189
  %v1200 = vpop.f32.mrf.mxu0
  %v1201 = vadd.f32 0.0, %v1200
  %v1202 = vpop.f32.mrf.mxu0
  %1203 = vmatprep.mubr.f32.mxu0 0.0
  %1204 = vmatmul.mubr.f32.gmra.mxu0 %v192
  %v1205 = vpop.f32.mrf.mxu0
  %v1206 = vadd.f32 0.0, %v1205
  %v1207 = vpop.f32.mrf.mxu0
  %1208 = vdwg.mxu0
  %v1209 = vmul.f32 %v1201, %v713
  %v1210 = vmul.f32 %v1206, %v714
  %v1211 = vmul.f32 %v1209, %v1209
  %v1212 = vmul.f32 %v1210, %v1210
  %1215 = vrot.lane.b32.xlu0 %v1211, 8
  %v1216 = vpop.permute.xlu0 %1215
  %1217 = vrot.lane.b32.xlu0 %v1212, 8
  %v1218 = vpop.permute.xlu0 %1217
  %v1221 = vsub.f32 %v1209, %v1216
  %v1222 = vsub.f32 %v1210, %v1218
  %1225 = vrot.lane.b32.xlu0 %v1114, 104
  %v1226 = vpop.permute.xlu0 %1225
  %1227 = vrot.lane.b32.xlu0 %v1119, 104
  %v1228 = vpop.permute.xlu0 %1227
  %1231 = vxpose.xlu0.b32.start [1/16] %v1226, 128
  %1232 = vxpose.xlu0.b32.cont [2/16] %v1228, 128
  %1233 = vxpose.xlu0.b32.cont [3/16] 0.0, 128
  %1234 = vxpose.xlu0.b32.cont [4/16] 0.0, 128
  %1235 = vxpose.xlu0.b32.cont [5/16] 0.0, 128
  %1236 = vxpose.xlu0.b32.cont [6/16] 0.0, 128
  %1237 = vxpose.xlu0.b32.cont [7/16] 0.0, 128
  %1238 = vxpose.xlu0.b32.cont [8/16] 0.0, 128
  %1239 = vxpose.xlu0.b32.cont [9/16] 0.0, 128
  %1240 = vxpose.xlu0.b32.cont [10/16] 0.0, 128
  %1241 = vxpose.xlu0.b32.cont [11/16] 0.0, 128
  %1242 = vxpose.xlu0.b32.cont [12/16] 0.0, 128
  %1243 = vxpose.xlu0.b32.cont [13/16] 0.0, 128
  %1244 = vxpose.xlu0.b32.cont [14/16] 0.0, 128
  %1245 = vxpose.xlu0.b32.cont [15/16] 0.0, 128
  %1246 = vxpose.xlu0.b32.end [16/16] 0.0, 128
  %v1247 = vpop.trf.xlu0
  %v1248 = vpop.trf.xlu0
  %v1249 = vpop.trf.xlu0
  %v1250 = vpop.trf.xlu0
  %v1251 = vpop.trf.xlu0
  %v1252 = vpop.trf.xlu0
  %v1253 = vpop.trf.xlu0
  %v1254 = vpop.trf.xlu0
  %v1255 = vpop.trf.xlu0
  %v1256 = vpop.trf.xlu0
  %v1257 = vpop.trf.xlu0
  %v1258 = vpop.trf.xlu0
  %v1259 = vpop.trf.xlu0
  %v1260 = vpop.trf.xlu0
  %v1261 = vpop.trf.xlu0
  %v1262 = vpop.trf.xlu0
  %v1263 = vlaneseq
  %v1264 = vshrl.u32 %v1263, 7
  %v1265 = vsub.s32 0, %v1264
  %v1266 = vrot.slane %v1247, %v1265
  %v1267 = vmul.f32 %v52, %v1266
  %v1268 = vmul.f32 %v53, %v1266
  %v1269 = vsel %vm73, %v1267, -inf
  %v1270 = vsel %vm74, %v1268, -inf
  %v1271 = vsel %vm56, %v1269, -inf
  %1272 = vmax.xlane.f32.xlu0 %v1271
  %v1273 = vpop.xlane.xlu0 %1272
  %v1274 = vsel %vm56, %v1270, -inf
  %1275 = vmax.xlane.f32.xlu0 %v1274
  %v1276 = vpop.xlane.xlu0 %1275
  %v1277 = vlaneseq
  %v1278 = vshrl.u32 %v1277, 7
  %v1279 = vsub.s32 1, %v1278
  %v1280 = vrot.slane %v1247, %v1279
  %v1281 = vmul.f32 %v52, %v1280
  %v1282 = vmul.f32 %v53, %v1280
  %v1283 = vsel %vm73, %v1281, -inf
  %v1284 = vsel %vm74, %v1282, -inf
  %v1285 = vsel %vm56, %v1283, -inf
  %1286 = vmax.xlane.f32.xlu0 %v1285
  %v1287 = vpop.xlane.xlu0 %1286
  %v1288 = vsel %vm56, %v1284, -inf
  %1289 = vmax.xlane.f32.xlu0 %v1288
  %v1290 = vpop.xlane.xlu0 %1289
  %v1291 = vlaneseq
  %v1292 = vshrl.u32 %v1291, 7
  %v1293 = vsub.s32 2, %v1292
  %v1294 = vrot.slane %v1247, %v1293
  %v1295 = vmul.f32 %v52, %v1294
  %v1296 = vmul.f32 %v53, %v1294
  %v1297 = vsel %vm73, %v1295, -inf
  %v1298 = vsel %vm74, %v1296, -inf
  %v1299 = vsel %vm56, %v1297, -inf
  %1300 = vmax.xlane.f32.xlu0 %v1299
  %v1301 = vpop.xlane.xlu0 %1300
  %v1302 = vsel %vm56, %v1298, -inf
  %1303 = vmax.xlane.f32.xlu0 %v1302
  %v1304 = vpop.xlane.xlu0 %1303
  %v1305 = vlaneseq
  %v1306 = vshrl.u32 %v1305, 7
  %v1307 = vsub.s32 3, %v1306
  %v1308 = vrot.slane %v1247, %v1307
  %v1309 = vmul.f32 %v52, %v1308
  %v1310 = vmul.f32 %v53, %v1308
  %v1311 = vsel %vm73, %v1309, -inf
  %v1312 = vsel %vm74, %v1310, -inf
  %v1313 = vsel %vm56, %v1311, -inf
  %1314 = vmax.xlane.f32.xlu0 %v1313
  %v1315 = vpop.xlane.xlu0 %1314
  %v1316 = vsel %vm56, %v1312, -inf
  %1317 = vmax.xlane.f32.xlu0 %v1316
  %v1318 = vpop.xlane.xlu0 %1317
  %v1319 = vlaneseq
  %v1320 = vshrl.u32 %v1319, 7
  %v1321 = vsub.s32 4, %v1320
  %v1322 = vrot.slane %v1247, %v1321
  %v1323 = vmul.f32 %v52, %v1322
  %v1324 = vmul.f32 %v53, %v1322
  %v1325 = vsel %vm73, %v1323, -inf
  %v1326 = vsel %vm74, %v1324, -inf
  %v1327 = vsel %vm56, %v1325, -inf
  %1328 = vmax.xlane.f32.xlu0 %v1327
  %v1329 = vpop.xlane.xlu0 %1328
  %v1330 = vsel %vm56, %v1326, -inf
  %1331 = vmax.xlane.f32.xlu0 %v1330
  %v1332 = vpop.xlane.xlu0 %1331
  %v1333 = vlaneseq
  %v1334 = vshrl.u32 %v1333, 7
  %v1335 = vsub.s32 5, %v1334
  %v1336 = vrot.slane %v1247, %v1335
  %v1337 = vmul.f32 %v52, %v1336
  %v1338 = vmul.f32 %v53, %v1336
  %v1339 = vsel %vm73, %v1337, -inf
  %v1340 = vsel %vm74, %v1338, -inf
  %v1341 = vsel %vm56, %v1339, -inf
  %1342 = vmax.xlane.f32.xlu0 %v1341
  %v1343 = vpop.xlane.xlu0 %1342
  %v1344 = vsel %vm56, %v1340, -inf
  %1345 = vmax.xlane.f32.xlu0 %v1344
  %v1346 = vpop.xlane.xlu0 %1345
  %v1347 = vlaneseq
  %v1348 = vshrl.u32 %v1347, 7
  %v1349 = vsub.s32 6, %v1348
  %v1350 = vrot.slane %v1247, %v1349
  %v1351 = vmul.f32 %v52, %v1350
  %v1352 = vmul.f32 %v53, %v1350
  %v1353 = vsel %vm73, %v1351, -inf
  %v1354 = vsel %vm74, %v1352, -inf
  %v1355 = vsel %vm56, %v1353, -inf
  %1356 = vmax.xlane.f32.xlu0 %v1355
  %v1357 = vpop.xlane.xlu0 %1356
  %v1358 = vsel %vm56, %v1354, -inf
  %1359 = vmax.xlane.f32.xlu0 %v1358
  %v1360 = vpop.xlane.xlu0 %1359
  %v1361 = vlaneseq
  %v1362 = vshrl.u32 %v1361, 7
  %v1363 = vsub.s32 7, %v1362
  %v1364 = vrot.slane %v1247, %v1363
  %v1365 = vmul.f32 %v52, %v1364
  %v1366 = vmul.f32 %v53, %v1364
  %v1367 = vsel %vm73, %v1365, -inf
  %v1368 = vsel %vm74, %v1366, -inf
  %v1369 = vsel %vm56, %v1367, -inf
  %1370 = vmax.xlane.f32.xlu0 %v1369
  %v1371 = vpop.xlane.xlu0 %1370
  %v1372 = vsel %vm56, %v1368, -inf
  %1373 = vmax.xlane.f32.xlu0 %v1372
  %v1374 = vpop.xlane.xlu0 %1373
  %v1375 = vsel %vm384, %v1273, %v1287
  %v1376 = vsel %vm384, %v1276, %v1290
  %v1377 = vsel %vm387, %v1375, %v1301
  %v1378 = vsel %vm387, %v1376, %v1304
  %v1379 = vsel %vm390, %v1377, %v1315
  %v1380 = vsel %vm390, %v1378, %v1318
  %v1381 = vsel %vm89, %v1379, %v1329
  %v1382 = vsel %vm89, %v1380, %v1332
  %v1383 = vsel %vm889, %v1381, %v1343
  %v1384 = vsel %vm889, %v1382, %v1346
  %v1385 = vsel %vm892, %v1383, %v1357
  %v1386 = vsel %vm892, %v1384, %v1360
  %v1387 = vsel %vm895, %v1385, %v1371
  %v1388 = vsel %vm895, %v1386, %v1374
  %v1389 = vsel %vm395, %v1209, 0.0
  %v1390 = vsel %vm396, %v1210, 0.0
  %v1391 = vsel %vm395, %v1387, 0.0
  %v1392 = vsel %vm396, %v1388, 0.0
  %v1393 = vsel %vm395, %v1221, 0.0
  %v1394 = vsel %vm396, %v1222, 0.0
  %1397 = vrot.lane.b32.xlu0 %v1389, 8
  %v1398 = vpop.permute.xlu0 %1397
  %1399 = vrot.lane.b32.xlu0 %v1390, 8
  %v1400 = vpop.permute.xlu0 %1399
  %1405 = vrot.lane.b32.xlu0 %v1391, 24
  %v1406 = vpop.permute.xlu0 %1405
  %1407 = vrot.lane.b32.xlu0 %v1392, 24
  %v1408 = vpop.permute.xlu0 %1407
  %1413 = vrot.lane.b32.xlu0 %v1393, 8
  %v1414 = vpop.permute.xlu0 %1413
  %1415 = vrot.lane.b32.xlu0 %v1394, 8
  %v1416 = vpop.permute.xlu0 %1415
  %v1419 = vsel %vm429, %v1025, %v1398
  %v1420 = vsel %vm429, %v1026, %v1400
  %v1421 = vsel %vm56, %v1419, %v1398
  %v1422 = vsel %vm56, %v1420, %v1400
  %v1423 = vsel %vm634, %v1421, %v1406
  %v1424 = vsel %vm634, %v1422, %v1408
  %v1425 = vsel %vm934, %v1423, %v1414
  %v1426 = vsel %vm934, %v1424, %v1416
  %v1428 = vlaneseq
  %v1429 = vshrl.u32 %v1428, 7
  %v1430 = vsub.s32 0, %v1429
  %v1431 = vrot.slane %v1034, %v1430
  %v1434 = vsel %vm943, %v1425, 0
  %v1437 = vsel %vm943, %v1426, 0
  %1439 = vmatprep.subr.mxu0 0.0
  %1440 = vmatpush1.msra.mxu0 0.0
  %1441 = vmatprep.subr.mxu0 0.0
  %1442 = vmatpush1.msra.mxu0 0.0
  %1443 = vmatprep.subr.mxu0 0.0
  %1444 = vmatpush1.msra.mxu0 0.0
  %1445 = vmatprep.subr.mxu0 0.0
  %1446 = vmatpush1.msra.mxu0 0.0
  %1447 = vmatprep.subr.mxu0 0.0
  %1448 = vmatpush1.msra.mxu0 0.0
  %1449 = vmatprep.subr.mxu0 0.0
  %1450 = vmatpush1.msra.mxu0 0.0
  %1451 = vmatprep.subr.mxu0 0.0
  %1452 = vmatpush1.msra.mxu0 0.0
  %1453 = vmatprep.subr.mxu0 0.0
  %1454 = vmatpush1.msra.mxu0 0.0
  %1455 = vmatprep.subr.mxu0 0.0
  %1456 = vmatpush1.msra.mxu0 0.0
  %1457 = vmatprep.subr.mxu0 0.0
  %1458 = vmatpush1.msra.mxu0 0.0
  %1459 = vmatprep.subr.mxu0 0.0
  %1460 = vmatpush1.msra.mxu0 0.0
  %1461 = vmatprep.subr.mxu0 0.0
  %1462 = vmatpush1.msra.mxu0 %v1033
  %1463 = vmatprep.subr.mxu0 0.0
  %1464 = vmatpush1.msra.mxu0 %v1032
  %1465 = vmatprep.subr.mxu0 0.0
  %1466 = vmatpush1.msra.mxu0 %v1031
  %1467 = vmatprep.subr.mxu0 0.0
  %1468 = vmatpush1.msra.mxu0 %v1030
  %1469 = vmatprep.subr.mxu0 0.0
  %1470 = vmatpush1.msra.mxu0 %v1029
  %1471 = vmatprep.subr.mxu0 0.0
  %1472 = vmatpush2.msra.mxu0 0.0
  %1473 = vmatprep.subr.mxu0 0.0
  %1474 = vmatpush2.msra.mxu0 0.0
  %1475 = vmatprep.subr.mxu0 0.0
  %1476 = vmatpush2.msra.mxu0 0.0
  %1477 = vmatprep.subr.mxu0 0.0
  %1478 = vmatpush2.msra.mxu0 0.0
  %1479 = vmatprep.subr.mxu0 0.0
  %1480 = vmatpush2.msra.mxu0 0.0
  %1481 = vmatprep.subr.mxu0 0.0
  %1482 = vmatpush2.msra.mxu0 0.0
  %1483 = vmatprep.subr.mxu0 0.0
  %1484 = vmatpush2.msra.mxu0 0.0
  %1485 = vmatprep.subr.mxu0 0.0
  %1486 = vmatpush2.msra.mxu0 0.0
  %1487 = vmatprep.subr.mxu0 0.0
  %1488 = vmatpush2.msra.mxu0 0.0
  %1489 = vmatprep.subr.mxu0 0.0
  %1490 = vmatpush2.msra.mxu0 0.0
  %1491 = vmatprep.subr.mxu0 0.0
  %1492 = vmatpush2.msra.mxu0 0.0
  %1493 = vmatprep.subr.mxu0 0.0
  %1494 = vmatpush2.msra.mxu0 0.0
  %1495 = vmatprep.subr.mxu0 0.0
  %1496 = vmatpush2.msra.mxu0 0.0
  %1497 = vmatprep.subr.mxu0 0.0
  %1498 = vmatpush2.msra.mxu0 0.0
  %1499 = vmatprep.subr.mxu0 0.0
  %1500 = vmatpush2.msra.mxu0 0.0
  %1501 = vmatprep.subr.mxu0 0.0
  %1502 = vmatpush2.msra.mxu0 0.0
  %1503 = vmatprep.mubr.f32.mxu0 0.0
  %1504 = vmatmul.mubr.f32.gmra.mxu0 %v1434
  %v1505 = vpop.f32.mrf.mxu0
  %v1506 = vadd.f32 %v1431, %v1505
  %v1507 = vpop.f32.mrf.mxu0
  %1508 = vmatprep.mubr.f32.mxu0 0.0
  %1509 = vmatmul.mubr.f32.gmra.mxu0 %v1437
  %v1510 = vpop.f32.mrf.mxu0
  %v1511 = vadd.f32 %v1431, %v1510
  %v1512 = vpop.f32.mrf.mxu0
  %1513 = vdwg.mxu0
  %v1514 = vmax.f32 %v1506, 0.0
  %v1515 = vmax.f32 %v1511, 0.0
  %1518 = vrot.lane.b32.xlu0 %v1514, 3
  %v1519 = vpop.permute.xlu0 %1518
  %1520 = vrot.lane.b32.xlu0 %v1515, 3
  %v1521 = vpop.permute.xlu0 %1520
  %v1524 = vadd.f32 %v75, %v1519
  %v1525 = vadd.f32 %v76, %v1521
  %v1526 = vmax.f32 %v1524, 0.0
  %v1527 = vmax.f32 %v1525, 0.0
  %v1528 = vmin.f32 %v1526, 1.0
  %v1529 = vmin.f32 %v1527, 1.0
  %1532 = vrot.lane.b32.xlu0 %v1528, 125
  %v1533 = vpop.permute.xlu0 %1532
  %1534 = vrot.lane.b32.xlu0 %v1529, 125
  %v1535 = vpop.permute.xlu0 %1534
  %1538 = vst.msk [vmem:[%s15] sm:$0xff] %vm384, %v1533
  %1539 = vst.msk [vmem:[%s15 + $0x8] sm:$0xff] %vm384, %v1535
  // Predicated region
  $region62: #{monstor_forward.1} parent=0 // pred_check
    _
  $region63: #{monstor_forward.1} parent=0 // pred_check_branch
    %1541 = sbr.rel (0) target = $region65
  $region64: #{monstor_forward.1} parent=0 // pred_region
    _
  $region65: #{monstor_forward.1} parent=0 // pred_fallthru
    _
  // Predicated region
  $region66: #{monstor_forward.1} parent=0 // pred_check
    _
  $region67: #{monstor_forward.1} parent=0 // pred_check_branch
    %1543 = sbr.rel (0) target = $region69
  $region68: #{monstor_forward.1} parent=0 // pred_region
    _
  $region69: #{monstor_forward.1} parent=0 // pred_fallthru
    _

</llo_original>
